<compile_context>
chip_gen: v7x
topology: tpu7x:2x2x1
jax: 0.10.0
libtpu: 0.0.40
codegen_flags: <defaults>
</compile_context>

<pallas_src>
import functools

import jax
import jax.numpy as jnp
from jax.experimental import pallas as pl
from jax.experimental.pallas import tpu as pltpu

PAD = 128  # lane-dense channel padding (multiple of 128)


def sage_fused_kernel(adj_ref, x_ref, wl_ref, wr_ref, shift_ref, o_ref, *,
                      num_layers):
    """Whole SAGE network in one kernel invocation.

    adj_ref:   (N, N)            bf16 row-normalized adjacency (mean agg)
    x_ref:     (N, PAD)          bf16 zero-padded input features
    wl_ref:    (L, PAD, PAD)     bf16 lin_l weights (transposed, BN scale folded)
    wr_ref:    (L, PAD, PAD)     bf16 lin_r weights (transposed, BN scale folded)
    shift_ref: (L, 1, PAD)       f32  folded bias/BN shift per layer
    o_ref:     (N, PAD)          f32  padded output of the last layer
    """
    h = x_ref[...]                            # (N, PAD) bf16 activation
    for l in range(num_layers):               # static unroll (small num_layers)
        # Re-load adj from VMEM each layer (vld is ~free; avoids keeping adj
        # pinned in vregs across all unrolled layers -> less spill pressure).
        adj = adj_ref[...]
        # mean aggregation over neighbors (MXU, f32 accumulate)
        agg = jnp.dot(adj, h, preferred_element_type=jnp.float32)
        # Two dots instead of lane-concat + fused K=256 matmul (see header).
        out = jnp.dot(agg.astype(jnp.bfloat16), wl_ref[l],
                      preferred_element_type=jnp.float32)
        out = out + jnp.dot(h, wr_ref[l], preferred_element_type=jnp.float32)
        out = out + shift_ref[l]              # folded bias + BatchNorm shift
        if l < num_layers - 1:
            # ReLU (dropout is identity in eval mode)
            h = jnp.maximum(out, 0.0).astype(jnp.bfloat16)
        else:
            o_ref[...] = out


def init_sage_params(key, dims):
    """Deterministic params (shapes follow torch SAGEConv / BatchNorm1d, eval)."""
    params = []
    for li in range(len(dims) - 1):
        cin, cout = dims[li], dims[li + 1]
        key, k1, k2, k3 = jax.random.split(key, 4)
        scale = 1.0 / jnp.sqrt(jnp.float32(cin))
        wl = jax.random.normal(k1, (cin, cout), jnp.float32) * scale   # lin_l.weight.T
        wr = jax.random.normal(k2, (cin, cout), jnp.float32) * scale   # lin_r.weight.T
        bl = jax.random.normal(k3, (1, cout), jnp.float32) * 0.1       # lin_l.bias
        gamma = jnp.ones((1, cout), jnp.float32)                       # bn.weight
        beta = jnp.zeros((1, cout), jnp.float32)                       # bn.bias
        rmean = jnp.zeros((1, cout), jnp.float32)                      # bn.running_mean
        rvar = jnp.ones((1, cout), jnp.float32)                        # bn.running_var
        params.append((wl, wr, bl, gamma, beta, rmean, rvar))
    return params


def fold_and_pad_params(params, dims, pad=PAD, eps=1e-5):
    """Fold eval-mode BN (+ lin_l bias) into scaled, padded Wl / Wr stacks."""
    num_layers = len(params)
    wls, wrs, shifts = [], [], []
    for li, (wl, wr, bl, gamma, beta, rmean, rvar) in enumerate(params):
        cin, cout = dims[li], dims[li + 1]
        if li < num_layers - 1:
            scale = gamma / jnp.sqrt(rvar + eps)            # (1, cout)
            shift = (bl - rmean) * scale + beta
        else:
            scale = jnp.ones((1, cout), jnp.float32)
            shift = bl
        wl_p = jnp.zeros((pad, pad), jnp.float32).at[:cin, :cout].set(wl * scale)
        wr_p = jnp.zeros((pad, pad), jnp.float32).at[:cin, :cout].set(wr * scale)
        s = jnp.zeros((1, pad), jnp.float32).at[:, :cout].set(shift)
        wls.append(wl_p)
        wrs.append(wr_p)
        shifts.append(s)
    return (jnp.stack(wls).astype(jnp.bfloat16),
            jnp.stack(wrs).astype(jnp.bfloat16),
            jnp.stack(shifts))


def sage_forward(x, adj_norm, params, dims, pad=PAD):
    N = x.shape[0]
    num_layers = len(params)
    in_channels, out_channels = dims[0], dims[-1]

    wl_stacked, wr_stacked, shifts = fold_and_pad_params(params, dims, pad=pad)
    adj_bf16 = adj_norm.astype(jnp.bfloat16)
    x_pad = (jnp.zeros((N, pad), jnp.float32)
             .at[:, :in_channels].set(x).astype(jnp.bfloat16))

    kernel = functools.partial(sage_fused_kernel, num_layers=num_layers)
    full = lambda shape: pl.BlockSpec(shape, lambda i: (0,) * len(shape))

    # Advisory cost hint: lets XLA schedule the host-side fold/pad, adj cast
    # and output slice around the custom call instead of serializing.
    flops = 2 * num_layers * (N * N * pad + 2 * N * pad * pad)
    bytes_accessed = (N * N * 2                     # adj bf16
                      + N * pad * 2                 # x bf16
                      + 2 * num_layers * pad * pad * 2   # Wl + Wr bf16
                      + num_layers * pad * 4        # shifts f32
                      + N * pad * 4)                # output f32
    cost = pl.CostEstimate(flops=flops, transcendentals=0,
                           bytes_accessed=bytes_accessed)

    out_pad = pl.pallas_call(
        kernel,
        out_shape=jax.ShapeDtypeStruct((N, pad), jnp.float32),
        grid=(1,),
        in_specs=[
            full((N, N)),                       # adj (bf16), loaded once
            full((N, pad)),                     # padded input features
            full((num_layers, pad, pad)),       # Wl stack, all layers
            full((num_layers, pad, pad)),       # Wr stack, all layers
            full((num_layers, 1, pad)),         # folded shifts, all layers
        ],
        out_specs=full((N, pad)),
        compiler_params=pltpu.CompilerParams(
            dimension_semantics=("arbitrary",)),
        cost_estimate=cost,
    )(adj_bf16, x_pad, wl_stacked, wr_stacked, shifts)
    return out_pad[:, :out_channels]


def sage_reference(x, adj_norm, params, eps=1e-5):
    """Pure-JAX f32 reference matching the PyTorch forward (eval mode)."""
    num_layers = len(params)
    h = x
    for li, (wl, wr, bl, gamma, beta, rmean, rvar) in enumerate(params):
        agg = adj_norm @ h
        out = agg @ wl + bl + h @ wr
        if li < num_layers - 1:
            out = gamma * (out - rmean) / jnp.sqrt(rvar + eps) + beta
            out = jnp.maximum(out, 0.0)
        h = out
    return h


if __name__ == "__main__":
    # small, TPU-friendly shapes
    N = 128
    in_channels, hidden_channels, out_channels = 16, 32, 8
    num_layers = 3
    dims = [in_channels] + [hidden_channels] * (num_layers - 1) + [out_channels]
    # dropout = 0.5  -> identity in eval mode

    key = jax.random.PRNGKey(0)
    key, kx, ka = jax.random.split(key, 3)

    # node features
    x = jax.random.normal(kx, (N, in_channels), jnp.float32)

    # random sparse-ish adjacency, row-normalized -> mean aggregation
    adj = (jax.random.uniform(ka, (N, N)) < 0.05).astype(jnp.float32)
    deg = jnp.sum(adj, axis=1, keepdims=True)
    adj_norm = adj / jnp.maximum(deg, 1.0)   # isolated nodes aggregate to 0

    params = init_sage_params(key, dims)

    out = sage_forward(x, adj_norm, params, dims)
    out = jax.block_until_ready(out)
    assert out.shape == (N, out_channels), out.shape
    assert bool(jnp.all(jnp.isfinite(out)))

    # bf16 matmuls vs f32 reference: loose tolerance check
    ref = sage_reference(x, adj_norm, params)
    err = float(jnp.max(jnp.abs(out - ref)))
    tol = 0.1 * (float(jnp.max(jnp.abs(ref))) + 1.0)
    assert err < tol, (err, tol)

    print("KERNEL_OK")
</pallas_src>

<mosaic_0001>
module attributes {stable_mosaic.version = 11 : i64} {
  func.func @sage_fused_kernel(%arg0: i32, %arg1: memref<128x128xbf16, #tpu.memory_space<vmem>>, %arg2: memref<128x128xbf16, #tpu.memory_space<vmem>>, %arg3: memref<3x128x128xbf16, #tpu.memory_space<vmem>>, %arg4: memref<3x128x128xbf16, #tpu.memory_space<vmem>>, %arg5: memref<3x1x128xf32, #tpu.memory_space<vmem>>, %arg6: memref<128x128xf32, #tpu.memory_space<vmem>>) attributes {dimension_semantics = [#tpu.dimension_semantics<arbitrary>], iteration_bounds = array<i64: 1>, scalar_prefetch = 0 : i64, scratch_operands = 0 : i64, tpu.core_type = #tpu.core_type<tc>, window_params = [{pipeline_mode = #tpu.pipeline_mode<synchronous>, transform_indices = @transform_0, window_bounds = array<i64: 128, 128>}, {pipeline_mode = #tpu.pipeline_mode<synchronous>, transform_indices = @transform_1, window_bounds = array<i64: 128, 128>}, {pipeline_mode = #tpu.pipeline_mode<synchronous>, transform_indices = @transform_2, window_bounds = array<i64: 3, 128, 128>}, {pipeline_mode = #tpu.pipeline_mode<synchronous>, transform_indices = @transform_3, window_bounds = array<i64: 3, 128, 128>}, {pipeline_mode = #tpu.pipeline_mode<synchronous>, transform_indices = @transform_4, window_bounds = array<i64: 3, 1, 128>}, {pipeline_mode = #tpu.pipeline_mode<synchronous>, transform_indices = @transform_5, window_bounds = array<i64: 128, 128>}]} {
    %c0 = arith.constant 0 : index
    %c0_0 = arith.constant 0 : index
    %0 = vector.load %arg2[%c0, %c0_0] : memref<128x128xbf16, #tpu.memory_space<vmem>>, vector<128x128xbf16>
    %c0_1 = arith.constant 0 : index
    %c0_2 = arith.constant 0 : index
    %1 = vector.load %arg1[%c0_1, %c0_2] : memref<128x128xbf16, #tpu.memory_space<vmem>>, vector<128x128xbf16>
    %cst = arith.constant dense<0.000000e+00> : vector<128x128xf32>
    %2 = tpu.matmul %1, %0, %cst {dimension_numbers = #tpu.dot_dimension_numbers<[1], [0], [0], [1], [0, 0, 1, 1], [], []>} : vector<128x128xbf16>, vector<128x128xbf16>, vector<128x128xf32> -> vector<128x128xf32>
    %3 = arith.truncf %2 : vector<128x128xf32> to vector<128x128xbf16>
    %c0_3 = arith.constant 0 : index
    %c0_4 = arith.constant 0 : index
    %c0_5 = arith.constant 0 : index
    %4 = vector.load %arg3[%c0_3, %c0_4, %c0_5] : memref<3x128x128xbf16, #tpu.memory_space<vmem>>, vector<1x128x128xbf16>
    %5 = vector.shape_cast %4 : vector<1x128x128xbf16> to vector<128x128xbf16>
    %cst_6 = arith.constant dense<0.000000e+00> : vector<128x128xf32>
    %6 = tpu.matmul %3, %5, %cst_6 {dimension_numbers = #tpu.dot_dimension_numbers<[1], [0], [0], [1], [0, 0, 1, 1], [], []>} : vector<128x128xbf16>, vector<128x128xbf16>, vector<128x128xf32> -> vector<128x128xf32>
    %c0_7 = arith.constant 0 : index
    %c0_8 = arith.constant 0 : index
    %c0_9 = arith.constant 0 : index
    %7 = vector.load %arg4[%c0_7, %c0_8, %c0_9] : memref<3x128x128xbf16, #tpu.memory_space<vmem>>, vector<1x128x128xbf16>
    %8 = vector.shape_cast %7 : vector<1x128x128xbf16> to vector<128x128xbf16>
    %cst_10 = arith.constant dense<0.000000e+00> : vector<128x128xf32>
    %9 = tpu.matmul %0, %8, %cst_10 {dimension_numbers = #tpu.dot_dimension_numbers<[1], [0], [0], [1], [0, 0, 1, 1], [], []>} : vector<128x128xbf16>, vector<128x128xbf16>, vector<128x128xf32> -> vector<128x128xf32>
    %10 = arith.addf %6, %9 : vector<128x128xf32>
    %c0_11 = arith.constant 0 : index
    %c0_12 = arith.constant 0 : index
    %c0_13 = arith.constant 0 : index
    %11 = vector.load %arg5[%c0_11, %c0_12, %c0_13] : memref<3x1x128xf32, #tpu.memory_space<vmem>>, vector<1x1x128xf32>
    %12 = vector.shape_cast %11 : vector<1x1x128xf32> to vector<1x128xf32>
    %13 = vector.broadcast %12 : vector<1x128xf32> to vector<128x128xf32>
    %14 = arith.addf %10, %13 : vector<128x128xf32>
    %cst_14 = arith.constant 0.000000e+00 : f32
    %15 = vector.broadcast %cst_14 : f32 to vector<128x128xf32>
    %16 = arith.maximumf %14, %15 : vector<128x128xf32>
    %17 = arith.truncf %16 : vector<128x128xf32> to vector<128x128xbf16>
    %c0_15 = arith.constant 0 : index
    %c0_16 = arith.constant 0 : index
    %18 = vector.load %arg1[%c0_15, %c0_16] : memref<128x128xbf16, #tpu.memory_space<vmem>>, vector<128x128xbf16>
    %cst_17 = arith.constant dense<0.000000e+00> : vector<128x128xf32>
    %19 = tpu.matmul %18, %17, %cst_17 {dimension_numbers = #tpu.dot_dimension_numbers<[1], [0], [0], [1], [0, 0, 1, 1], [], []>} : vector<128x128xbf16>, vector<128x128xbf16>, vector<128x128xf32> -> vector<128x128xf32>
    %20 = arith.truncf %19 : vector<128x128xf32> to vector<128x128xbf16>
    %c1 = arith.constant 1 : index
    %c0_18 = arith.constant 0 : index
    %c0_19 = arith.constant 0 : index
    %21 = vector.load %arg3[%c1, %c0_18, %c0_19] : memref<3x128x128xbf16, #tpu.memory_space<vmem>>, vector<1x128x128xbf16>
    %22 = vector.shape_cast %21 : vector<1x128x128xbf16> to vector<128x128xbf16>
    %cst_20 = arith.constant dense<0.000000e+00> : vector<128x128xf32>
    %23 = tpu.matmul %20, %22, %cst_20 {dimension_numbers = #tpu.dot_dimension_numbers<[1], [0], [0], [1], [0, 0, 1, 1], [], []>} : vector<128x128xbf16>, vector<128x128xbf16>, vector<128x128xf32> -> vector<128x128xf32>
    %c1_21 = arith.constant 1 : index
    %c0_22 = arith.constant 0 : index
    %c0_23 = arith.constant 0 : index
    %24 = vector.load %arg4[%c1_21, %c0_22, %c0_23] : memref<3x128x128xbf16, #tpu.memory_space<vmem>>, vector<1x128x128xbf16>
    %25 = vector.shape_cast %24 : vector<1x128x128xbf16> to vector<128x128xbf16>
    %cst_24 = arith.constant dense<0.000000e+00> : vector<128x128xf32>
    %26 = tpu.matmul %17, %25, %cst_24 {dimension_numbers = #tpu.dot_dimension_numbers<[1], [0], [0], [1], [0, 0, 1, 1], [], []>} : vector<128x128xbf16>, vector<128x128xbf16>, vector<128x128xf32> -> vector<128x128xf32>
    %27 = arith.addf %23, %26 : vector<128x128xf32>
    %c1_25 = arith.constant 1 : index
    %c0_26 = arith.constant 0 : index
    %c0_27 = arith.constant 0 : index
    %28 = vector.load %arg5[%c1_25, %c0_26, %c0_27] : memref<3x1x128xf32, #tpu.memory_space<vmem>>, vector<1x1x128xf32>
    %29 = vector.shape_cast %28 : vector<1x1x128xf32> to vector<1x128xf32>
    %30 = vector.broadcast %29 : vector<1x128xf32> to vector<128x128xf32>
    %31 = arith.addf %27, %30 : vector<128x128xf32>
    %cst_28 = arith.constant 0.000000e+00 : f32
    %32 = vector.broadcast %cst_28 : f32 to vector<128x128xf32>
    %33 = arith.maximumf %31, %32 : vector<128x128xf32>
    %34 = arith.truncf %33 : vector<128x128xf32> to vector<128x128xbf16>
    %c0_29 = arith.constant 0 : index
    %c0_30 = arith.constant 0 : index
    %35 = vector.load %arg1[%c0_29, %c0_30] : memref<128x128xbf16, #tpu.memory_space<vmem>>, vector<128x128xbf16>
    %cst_31 = arith.constant dense<0.000000e+00> : vector<128x128xf32>
    %36 = tpu.matmul %35, %34, %cst_31 {dimension_numbers = #tpu.dot_dimension_numbers<[1], [0], [0], [1], [0, 0, 1, 1], [], []>} : vector<128x128xbf16>, vector<128x128xbf16>, vector<128x128xf32> -> vector<128x128xf32>
    %37 = arith.truncf %36 : vector<128x128xf32> to vector<128x128xbf16>
    %c2 = arith.constant 2 : index
    %c0_32 = arith.constant 0 : index
    %c0_33 = arith.constant 0 : index
    %38 = vector.load %arg3[%c2, %c0_32, %c0_33] : memref<3x128x128xbf16, #tpu.memory_space<vmem>>, vector<1x128x128xbf16>
    %39 = vector.shape_cast %38 : vector<1x128x128xbf16> to vector<128x128xbf16>
    %cst_34 = arith.constant dense<0.000000e+00> : vector<128x128xf32>
    %40 = tpu.matmul %37, %39, %cst_34 {dimension_numbers = #tpu.dot_dimension_numbers<[1], [0], [0], [1], [0, 0, 1, 1], [], []>} : vector<128x128xbf16>, vector<128x128xbf16>, vector<128x128xf32> -> vector<128x128xf32>
    %c2_35 = arith.constant 2 : index
    %c0_36 = arith.constant 0 : index
    %c0_37 = arith.constant 0 : index
    %41 = vector.load %arg4[%c2_35, %c0_36, %c0_37] : memref<3x128x128xbf16, #tpu.memory_space<vmem>>, vector<1x128x128xbf16>
    %42 = vector.shape_cast %41 : vector<1x128x128xbf16> to vector<128x128xbf16>
    %cst_38 = arith.constant dense<0.000000e+00> : vector<128x128xf32>
    %43 = tpu.matmul %34, %42, %cst_38 {dimension_numbers = #tpu.dot_dimension_numbers<[1], [0], [0], [1], [0, 0, 1, 1], [], []>} : vector<128x128xbf16>, vector<128x128xbf16>, vector<128x128xf32> -> vector<128x128xf32>
    %44 = arith.addf %40, %43 : vector<128x128xf32>
    %c2_39 = arith.constant 2 : index
    %c0_40 = arith.constant 0 : index
    %c0_41 = arith.constant 0 : index
    %45 = vector.load %arg5[%c2_39, %c0_40, %c0_41] : memref<3x1x128xf32, #tpu.memory_space<vmem>>, vector<1x1x128xf32>
    %46 = vector.shape_cast %45 : vector<1x1x128xf32> to vector<1x128xf32>
    %47 = vector.broadcast %46 : vector<1x128xf32> to vector<128x128xf32>
    %48 = arith.addf %44, %47 : vector<128x128xf32>
    %c0_42 = arith.constant 0 : index
    %c0_43 = arith.constant 0 : index
    %49 = vector.load %arg6[%c0_42, %c0_43] : memref<128x128xf32, #tpu.memory_space<vmem>>, vector<128x128xf32>
    tpu.vector_store %arg6[%c0_42, %c0_43], %48 {strides = array<i32>} : memref<128x128xf32, #tpu.memory_space<vmem>>, vector<128x128xf32>,
    return
  }
  func.func @transform_0(%arg0: i32) -> (i32, i32) {
    %c0_i32 = arith.constant 0 : i32
    %c0_i32_0 = arith.constant 0 : i32
    %c0_i32_1 = arith.constant 0 : i32
    return %c0_i32, %c0_i32_0 : i32, i32
  }
  func.func @transform_1(%arg0: i32) -> (i32, i32) {
    %c0_i32 = arith.constant 0 : i32
    %c0_i32_0 = arith.constant 0 : i32
    %c0_i32_1 = arith.constant 0 : i32
    return %c0_i32, %c0_i32_0 : i32, i32
  }
  func.func @transform_2(%arg0: i32) -> (i32, i32, i32) {
    %c0_i32 = arith.constant 0 : i32
    %c0_i32_0 = arith.constant 0 : i32
    %c0_i32_1 = arith.constant 0 : i32
    %c0_i32_2 = arith.constant 0 : i32
    return %c0_i32, %c0_i32_0, %c0_i32_1 : i32, i32, i32
  }
  func.func @transform_3(%arg0: i32) -> (i32, i32, i32) {
    %c0_i32 = arith.constant 0 : i32
    %c0_i32_0 = arith.constant 0 : i32
    %c0_i32_1 = arith.constant 0 : i32
    %c0_i32_2 = arith.constant 0 : i32
    return %c0_i32, %c0_i32_0, %c0_i32_1 : i32, i32, i32
  }
  func.func @transform_4(%arg0: i32) -> (i32, i32, i32) {
    %c0_i32 = arith.constant 0 : i32
    %c0_i32_0 = arith.constant 0 : i32
    %c0_i32_1 = arith.constant 0 : i32
    %c0_i32_2 = arith.constant 0 : i32
    return %c0_i32, %c0_i32_0, %c0_i32_1 : i32, i32, i32
  }
  func.func @transform_5(%arg0: i32) -> (i32, i32) {
    %c0_i32 = arith.constant 0 : i32
    %c0_i32_0 = arith.constant 0 : i32
    %c0_i32_1 = arith.constant 0 : i32
    return %c0_i32, %c0_i32_0 : i32, i32
  }
}

</mosaic_0001>

<llo_original>
// kernel: tpu_custom_call.1
$region0: #{tpu_custom_call.1}
  #allocation0 [shape = 'u32[]', space=smem, size = 0x4, offset = 0x4, fixed_abs, tag = 'smem constant byte address 0x4 - core index']
  #allocation1 [shape = 'u32[144,128]{1,0:T(1,128)}', space=vmem, size = 0x12000, scoped, tag = 'internal scratch']
  %s0 = inlined_call_operand.hbm [shape: bf16[128,128], index: 0, kind: input, shape index: {}]
  %s1 = inlined_call_operand.hbm [shape: bf16[128,128], index: 1, kind: input, shape index: {}]
  %s2 = inlined_call_operand.hbm [shape: bf16[3,128,128], index: 2, kind: input, shape index: {}]
  %s3 = inlined_call_operand.hbm [shape: bf16[3,128,128], index: 3, kind: input, shape index: {}]
  %s4 = inlined_call_operand.vmem [shape: f32[3,1,128], index: 4, kind: input, shape index: {}]
  %s5 = inlined_call_operand.hbm [shape: f32[128,128], index: 5, kind: output, shape index: {}]
  %s6 = sld [smem:[#allocation0]]
  $region46: #{tpu_custom_call.1} parent=0
    _
  %s8 = ssub.s32 1, %s6
  %s9 = scalar_select 0, %s8, %s6
  $region1: #{tpu_custom_call.1} parent=0
    #allocation2 [shape = 'u8[32768]{0}', space=vmem, size = 0x8000, scoped, tag = 'input window, operand 0, single buffered']
    #allocation3 [shape = 's32[1]{0}', space=sflag, size = 0x4, scoped, tag = 'scoped memory for tpu_custom_call.1']
    #allocation4 [shape = 's32[1]{0}', space=sflag, size = 0x4, scoped, tag = 'scoped memory for tpu_custom_call.1']
    #allocation5 [shape = 'u8[32768]{0}', space=vmem, size = 0x8000, scoped, tag = 'input window, operand 1, single buffered']
    #allocation6 [shape = 's32[1]{0}', space=sflag, size = 0x4, scoped, tag = 'scoped memory for tpu_custom_call.1']
    #allocation7 [shape = 'u8[98304]{0}', space=vmem, size = 0x18000, scoped, tag = 'input window, operand 2, single buffered']
    #allocation8 [shape = 'u8[98304]{0}', space=vmem, size = 0x18000, scoped, tag = 'input window, operand 3, single buffered']
    #allocation9 [shape = 's32[1]{0}', space=sflag, size = 0x4, scoped, tag = 'scoped memory for tpu_custom_call.1']
    #allocation10 [shape = 'u8[65536]{0}', space=vmem, size = 0x10000, scoped, tag = 'output window, operand 0, single buffered']
    %10 = vsyncpa [#allocation3], 0
    %11 = vsyncpa [#allocation6], 0
    %12 = vsyncpa [#allocation9], 0
    %13 = vsyncpa [#allocation4], 0
    // Predicated region
    $region2: #{tpu_custom_call.1} parent=1 // pred_check
      _
    $region3: #{tpu_custom_call.1} parent=1 // pred_check_branch
      %15 = sbr.rel (0) target = $region5
    $region4: #{tpu_custom_call.1} parent=1 // pred_region
      %s17 = ssub.s32 1024, 1024
      %18 = vsyncadd [#allocation3], %s17
      %s19 = sshll.u32 [#allocation2], 4
      %s20 = int_to_ptr.vmem [resolvable:$true] %s19
      %25 = dma.hbm_to_vmem [thread:$0]  %s0, 1024, %s20, [#allocation3], 64, 64, 4
    $region5: #{tpu_custom_call.1} parent=1 // pred_fallthru
      _
    // Predicated region
    $region6: #{tpu_custom_call.1} parent=1 // pred_check
      _
    $region7: #{tpu_custom_call.1} parent=1 // pred_check_branch
      %27 = sbr.rel (0) target = $region9
    $region8: #{tpu_custom_call.1} parent=1 // pred_region
      %s29 = ssub.s32 1024, 1024
      %30 = vsyncadd [#allocation6], %s29
      %s31 = sshll.u32 [#allocation5], 4
      %s32 = int_to_ptr.vmem [resolvable:$true] %s31
      %37 = dma.hbm_to_vmem [thread:$0]  %s1, 1024, %s32, [#allocation6], 64, 64, 4
    $region9: #{tpu_custom_call.1} parent=1 // pred_fallthru
      _
    // Predicated region
    $region10: #{tpu_custom_call.1} parent=1 // pred_check
      _
    $region11: #{tpu_custom_call.1} parent=1 // pred_check_branch
      %39 = sbr.rel (0) target = $region13
    $region12: #{tpu_custom_call.1} parent=1 // pred_region
      %s41 = ssub.s32 3072, 3072
      %42 = vsyncadd [#allocation6], %s41
      %s43 = sshll.u32 [#allocation7], 4
      %s44 = int_to_ptr.vmem [resolvable:$true] %s43
      %49 = dma.hbm_to_vmem [thread:$0]  %s2, 3072, %s44, [#allocation6], 64, 64, 4
    $region13: #{tpu_custom_call.1} parent=1 // pred_fallthru
      _
    // Predicated region
    $region14: #{tpu_custom_call.1} parent=1 // pred_check
      _
    $region15: #{tpu_custom_call.1} parent=1 // pred_check_branch
      %51 = sbr.rel (0) target = $region17
    $region16: #{tpu_custom_call.1} parent=1 // pred_region
      %s53 = ssub.s32 3072, 3072
      %54 = vsyncadd [#allocation9], %s53
      %s55 = sshll.u32 [#allocation8], 4
      %s56 = int_to_ptr.vmem [resolvable:$true] %s55
      %61 = dma.hbm_to_vmem [thread:$0]  %s3, 3072, %s56, [#allocation9], 64, 64, 4
    $region17: #{tpu_custom_call.1} parent=1 // pred_fallthru
      _
    // Predicated region
    $region18: #{tpu_custom_call.1} parent=1 // pred_check
      _
    $region19: #{tpu_custom_call.1} parent=1 // pred_check_branch
      %63 = sbr.rel (0) target = $region21
    $region20: #{tpu_custom_call.1} parent=1 // pred_region
      _
    $region21: #{tpu_custom_call.1} parent=1 // pred_fallthru
      _
    // Predicated region
    $region22: #{tpu_custom_call.1} parent=1 // pred_check
      _
    $region23: #{tpu_custom_call.1} parent=1 // pred_check_branch
      %65 = sbr.rel (0) target = $region25
    $region24: #{tpu_custom_call.1} parent=1 // pred_region
      %66 = dma.done [#allocation3], 1024
    $region25: #{tpu_custom_call.1} parent=1 // pred_fallthru
      _
    // Predicated region
    $region26: #{tpu_custom_call.1} parent=1 // pred_check
      _
    $region27: #{tpu_custom_call.1} parent=1 // pred_check_branch
      %68 = sbr.rel (0) target = $region29
    $region28: #{tpu_custom_call.1} parent=1 // pred_region
      %69 = dma.done [#allocation6], 1024
    $region29: #{tpu_custom_call.1} parent=1 // pred_fallthru
      _
    // Predicated region
    $region30: #{tpu_custom_call.1} parent=1 // pred_check
      _
    $region31: #{tpu_custom_call.1} parent=1 // pred_check_branch
      %71 = sbr.rel (0) target = $region33
    $region32: #{tpu_custom_call.1} parent=1 // pred_region
      %72 = dma.done [#allocation6], 3072
    $region33: #{tpu_custom_call.1} parent=1 // pred_fallthru
      _
    // Predicated region
    $region34: #{tpu_custom_call.1} parent=1 // pred_check
      _
    $region35: #{tpu_custom_call.1} parent=1 // pred_check_branch
      %74 = sbr.rel (0) target = $region37
    $region36: #{tpu_custom_call.1} parent=1 // pred_region
      %75 = dma.done [#allocation9], 3072
    $region37: #{tpu_custom_call.1} parent=1 // pred_fallthru
      _
    %v77 = vld [vmem:[#allocation5] sm:$0xf]
    %v78 = vld [vmem:[#allocation5 + $0x4] sm:$0xf]
    %v79 = vld [vmem:[#allocation5 + $0x8] sm:$0xf]
    %v80 = vld [vmem:[#allocation5 + $0xc] sm:$0xf]
    %v81 = vld [vmem:[#allocation5 + $0x10] sm:$0xf]
    %v82 = vld [vmem:[#allocation5 + $0x14] sm:$0xf]
    %v83 = vld [vmem:[#allocation5 + $0x18] sm:$0xf]
    %v84 = vld [vmem:[#allocation5 + $0x1c] sm:$0xf]
    %v85 = vld [vmem:[#allocation5 + $0x20] sm:$0xf]
    %v86 = vld [vmem:[#allocation5 + $0x24] sm:$0xf]
    %v87 = vld [vmem:[#allocation5 + $0x28] sm:$0xf]
    %v88 = vld [vmem:[#allocation5 + $0x2c] sm:$0xf]
    %v89 = vld [vmem:[#allocation5 + $0x30] sm:$0xf]
    %v90 = vld [vmem:[#allocation5 + $0x34] sm:$0xf]
    %v91 = vld [vmem:[#allocation5 + $0x38] sm:$0xf]
    %v92 = vld [vmem:[#allocation5 + $0x3c] sm:$0xf]
    %v93 = vld [vmem:[#allocation2] sm:$0xf]
    %v94 = vld [vmem:[#allocation2 + $0x4] sm:$0xf]
    %v95 = vld [vmem:[#allocation2 + $0x8] sm:$0xf]
    %v96 = vld [vmem:[#allocation2 + $0xc] sm:$0xf]
    %v97 = vld [vmem:[#allocation2 + $0x10] sm:$0xf]
    %v98 = vld [vmem:[#allocation2 + $0x14] sm:$0xf]
    %v99 = vld [vmem:[#allocation2 + $0x18] sm:$0xf]
    %v100 = vld [vmem:[#allocation2 + $0x1c] sm:$0xf]
    %v101 = vld [vmem:[#allocation2 + $0x20] sm:$0xf]
    %v102 = vld [vmem:[#allocation2 + $0x24] sm:$0xf]
    %v103 = vld [vmem:[#allocation2 + $0x28] sm:$0xf]
    %v104 = vld [vmem:[#allocation2 + $0x2c] sm:$0xf]
    %v105 = vld [vmem:[#allocation2 + $0x30] sm:$0xf]
    %v106 = vld [vmem:[#allocation2 + $0x34] sm:$0xf]
    %v107 = vld [vmem:[#allocation2 + $0x38] sm:$0xf]
    %v108 = vld [vmem:[#allocation2 + $0x3c] sm:$0xf]
    %v125 = vunpack.c.l.b16 %v93
    %v126 = vunpack.c.l.b16 %v94
    %v127 = vunpack.c.l.b16 %v95
    %v128 = vunpack.c.l.b16 %v96
    %v129 = vunpack.c.l.b16 %v97
    %v130 = vunpack.c.l.b16 %v98
    %v131 = vunpack.c.l.b16 %v99
    %v132 = vunpack.c.l.b16 %v100
    %v133 = vunpack.c.l.b16 %v101
    %v134 = vunpack.c.l.b16 %v102
    %v135 = vunpack.c.l.b16 %v103
    %v136 = vunpack.c.l.b16 %v104
    %v137 = vunpack.c.l.b16 %v105
    %v138 = vunpack.c.l.b16 %v106
    %v139 = vunpack.c.l.b16 %v107
    %v140 = vunpack.c.l.b16 %v108
    %v141 = vpack.c.b16 %v126, %v125
    %v142 = vpack.c.b16 %v128, %v127
    %v143 = vpack.c.b16 %v130, %v129
    %v144 = vpack.c.b16 %v132, %v131
    %v145 = vpack.c.b16 %v134, %v133
    %v146 = vpack.c.b16 %v136, %v135
    %v147 = vpack.c.b16 %v138, %v137
    %v148 = vpack.c.b16 %v140, %v139
    %v173 = vunpack.c.l.b16 %v77
    %v174 = vunpack.c.l.b16 %v78
    %v175 = vunpack.c.l.b16 %v79
    %v176 = vunpack.c.l.b16 %v80
    %v177 = vunpack.c.l.b16 %v81
    %v178 = vunpack.c.l.b16 %v82
    %v179 = vunpack.c.l.b16 %v83
    %v180 = vunpack.c.l.b16 %v84
    %v181 = vunpack.c.l.b16 %v85
    %v182 = vunpack.c.l.b16 %v86
    %v183 = vunpack.c.l.b16 %v87
    %v184 = vunpack.c.l.b16 %v88
    %v185 = vunpack.c.l.b16 %v89
    %v186 = vunpack.c.l.b16 %v90
    %v187 = vunpack.c.l.b16 %v91
    %v188 = vunpack.c.l.b16 %v92
    %v189 = vpack.c.b16 %v174, %v173
    %v190 = vpack.c.b16 %v176, %v175
    %v191 = vpack.c.b16 %v178, %v177
    %v192 = vpack.c.b16 %v180, %v179
    %v193 = vpack.c.b16 %v182, %v181
    %v194 = vpack.c.b16 %v184, %v183
    %v195 = vpack.c.b16 %v186, %v185
    %v196 = vpack.c.b16 %v188, %v187
    %205 = vmatprep.subr.bf16.mxu0 0
    %206 = vmatpush1.bf16.msra.mxu0 %v189
    %207 = vmatprep.subr.bf16.mxu0 0
    %208 = vmatpush1.bf16.msra.mxu0 %v190
    %209 = vmatprep.subr.bf16.mxu0 0
    %210 = vmatpush1.bf16.msra.mxu0 %v191
    %211 = vmatprep.subr.bf16.mxu0 0
    %212 = vmatpush1.bf16.msra.mxu0 %v192
    %213 = vmatprep.subr.bf16.mxu0 0
    %214 = vmatpush1.bf16.msra.mxu0 %v193
    %215 = vmatprep.subr.bf16.mxu0 0
    %216 = vmatpush1.bf16.msra.mxu0 %v194
    %217 = vmatprep.subr.bf16.mxu0 0
    %218 = vmatpush1.bf16.msra.mxu0 %v195
    %219 = vmatprep.subr.bf16.mxu0 0
    %220 = vmatpush1.bf16.msra.mxu0 %v196
    %221 = vmatprep.subr.bf16.mxu0 0
    %222 = vmatpush1.bf16.msra.mxu0 0
    %223 = vmatprep.subr.bf16.mxu0 0
    %224 = vmatpush1.bf16.msra.mxu0 0
    %225 = vmatprep.subr.bf16.mxu0 0
    %226 = vmatpush1.bf16.msra.mxu0 0
    %227 = vmatprep.subr.bf16.mxu0 0
    %228 = vmatpush1.bf16.msra.mxu0 0
    %229 = vmatprep.subr.bf16.mxu0 0
    %230 = vmatpush1.bf16.msra.mxu0 0
    %231 = vmatprep.subr.bf16.mxu0 0
    %232 = vmatpush1.bf16.msra.mxu0 0
    %233 = vmatprep.subr.bf16.mxu0 0
    %234 = vmatpush1.bf16.msra.mxu0 0
    %235 = vmatprep.subr.bf16.mxu0 0
    %236 = vmatpush1.bf16.msra.mxu0 0
    %237 = vmatprep.mubr.bf16.mxu0 0
    %238 = vmatmul.mubr.bf16.gmra.mrb[0].mxu0 %v141
    %v239 = vpop.f32.mrb[0].mxu0
    %v240 = vadd.f32 0.0, %v239
    %v241 = vpop.f32.mrb[0].mxu0
    %v242 = vpop.f32.mrb[0].mxu0
    %v243 = vadd.f32 0.0, %v242
    %v244 = vpop.f32.mrb[0].mxu0
    %245 = vmatprep.mubr.bf16.mxu0 0
    %246 = vmatmul.mubr.bf16.gmra.mrb[0].mxu0 %v142
    %v247 = vpop.f32.mrb[0].mxu0
    %v248 = vadd.f32 0.0, %v247
    %v249 = vpop.f32.mrb[0].mxu0
    %v250 = vpop.f32.mrb[0].mxu0
    %v251 = vadd.f32 0.0, %v250
    %v252 = vpop.f32.mrb[0].mxu0
    %253 = vmatprep.mubr.bf16.mxu0 0
    %254 = vmatmul.mubr.bf16.gmra.mrb[0].mxu0 %v143
    %v255 = vpop.f32.mrb[0].mxu0
    %v256 = vadd.f32 0.0, %v255
    %v257 = vpop.f32.mrb[0].mxu0
    %v258 = vpop.f32.mrb[0].mxu0
    %v259 = vadd.f32 0.0, %v258
    %v260 = vpop.f32.mrb[0].mxu0
    %261 = vmatprep.mubr.bf16.mxu0 0
    %262 = vmatmul.mubr.bf16.gmra.mrb[0].mxu0 %v144
    %v263 = vpop.f32.mrb[0].mxu0
    %v264 = vadd.f32 0.0, %v263
    %v265 = vpop.f32.mrb[0].mxu0
    %v266 = vpop.f32.mrb[0].mxu0
    %v267 = vadd.f32 0.0, %v266
    %v268 = vpop.f32.mrb[0].mxu0
    %269 = vmatprep.mubr.bf16.mxu0 0
    %270 = vmatmul.mubr.bf16.gmra.mrb[0].mxu0 %v145
    %v271 = vpop.f32.mrb[0].mxu0
    %v272 = vadd.f32 0.0, %v271
    %v273 = vpop.f32.mrb[0].mxu0
    %v274 = vpop.f32.mrb[0].mxu0
    %v275 = vadd.f32 0.0, %v274
    %v276 = vpop.f32.mrb[0].mxu0
    %277 = vmatprep.mubr.bf16.mxu0 0
    %278 = vmatmul.mubr.bf16.gmra.mrb[0].mxu0 %v146
    %v279 = vpop.f32.mrb[0].mxu0
    %v280 = vadd.f32 0.0, %v279
    %v281 = vpop.f32.mrb[0].mxu0
    %v282 = vpop.f32.mrb[0].mxu0
    %v283 = vadd.f32 0.0, %v282
    %v284 = vpop.f32.mrb[0].mxu0
    %285 = vmatprep.mubr.bf16.mxu0 0
    %286 = vmatmul.mubr.bf16.gmra.mrb[0].mxu0 %v147
    %v287 = vpop.f32.mrb[0].mxu0
    %v288 = vadd.f32 0.0, %v287
    %v289 = vpop.f32.mrb[0].mxu0
    %v290 = vpop.f32.mrb[0].mxu0
    %v291 = vadd.f32 0.0, %v290
    %v292 = vpop.f32.mrb[0].mxu0
    %293 = vmatprep.mubr.bf16.mxu0 0
    %294 = vmatmul.mubr.bf16.gmra.mrb[0].mxu0 %v148
    %v295 = vpop.f32.mrb[0].mxu0
    %v296 = vadd.f32 0.0, %v295
    %v297 = vpop.f32.mrb[0].mxu0
    %v298 = vpop.f32.mrb[0].mxu0
    %v299 = vadd.f32 0.0, %v298
    %v300 = vpop.f32.mrb[0].mxu0
    %301 = vdwg.mxu0
    %v302 = vpack.c.bf16 %v243, %v240
    %v303 = vpack.c.bf16 %v251, %v248
    %v304 = vpack.c.bf16 %v259, %v256
    %v305 = vpack.c.bf16 %v267, %v264
    %v306 = vpack.c.bf16 %v275, %v272
    %v307 = vpack.c.bf16 %v283, %v280
    %v308 = vpack.c.bf16 %v291, %v288
    %v309 = vpack.c.bf16 %v299, %v296
    %v310 = vld [vmem:[#allocation7] sm:$0xf]
    %v311 = vld [vmem:[#allocation7 + $0x4] sm:$0xf]
    %v312 = vld [vmem:[#allocation7 + $0x8] sm:$0xf]
    %v313 = vld [vmem:[#allocation7 + $0xc] sm:$0xf]
    %v314 = vld [vmem:[#allocation7 + $0x10] sm:$0xf]
    %v315 = vld [vmem:[#allocation7 + $0x14] sm:$0xf]
    %v316 = vld [vmem:[#allocation7 + $0x18] sm:$0xf]
    %v317 = vld [vmem:[#allocation7 + $0x1c] sm:$0xf]
    %v318 = vld [vmem:[#allocation7 + $0x20] sm:$0xf]
    %v319 = vld [vmem:[#allocation7 + $0x24] sm:$0xf]
    %v320 = vld [vmem:[#allocation7 + $0x28] sm:$0xf]
    %v321 = vld [vmem:[#allocation7 + $0x2c] sm:$0xf]
    %v322 = vld [vmem:[#allocation7 + $0x30] sm:$0xf]
    %v323 = vld [vmem:[#allocation7 + $0x34] sm:$0xf]
    %v324 = vld [vmem:[#allocation7 + $0x38] sm:$0xf]
    %v325 = vld [vmem:[#allocation7 + $0x3c] sm:$0xf]
    %v326 = vld [vmem:[#allocation8] sm:$0xf]
    %v327 = vld [vmem:[#allocation8 + $0x4] sm:$0xf]
    %v328 = vld [vmem:[#allocation8 + $0x8] sm:$0xf]
    %v329 = vld [vmem:[#allocation8 + $0xc] sm:$0xf]
    %v330 = vld [vmem:[#allocation8 + $0x10] sm:$0xf]
    %v331 = vld [vmem:[#allocation8 + $0x14] sm:$0xf]
    %v332 = vld [vmem:[#allocation8 + $0x18] sm:$0xf]
    %v333 = vld [vmem:[#allocation8 + $0x1c] sm:$0xf]
    %v334 = vld [vmem:[#allocation8 + $0x20] sm:$0xf]
    %v335 = vld [vmem:[#allocation8 + $0x24] sm:$0xf]
    %v336 = vld [vmem:[#allocation8 + $0x28] sm:$0xf]
    %v337 = vld [vmem:[#allocation8 + $0x2c] sm:$0xf]
    %v338 = vld [vmem:[#allocation8 + $0x30] sm:$0xf]
    %v339 = vld [vmem:[#allocation8 + $0x34] sm:$0xf]
    %v340 = vld [vmem:[#allocation8 + $0x38] sm:$0xf]
    %v341 = vld [vmem:[#allocation8 + $0x3c] sm:$0xf]
    %v358 = vunpack.c.l.b16 %v326
    %v359 = vunpack.c.l.b16 %v327
    %v360 = vunpack.c.l.b16 %v328
    %v361 = vunpack.c.l.b16 %v329
    %v362 = vunpack.c.l.b16 %v330
    %v363 = vunpack.c.l.b16 %v331
    %v364 = vunpack.c.l.b16 %v332
    %v365 = vunpack.c.l.b16 %v333
    %v366 = vunpack.c.l.b16 %v334
    %v367 = vunpack.c.l.b16 %v335
    %v368 = vunpack.c.l.b16 %v336
    %v369 = vunpack.c.l.b16 %v337
    %v370 = vunpack.c.l.b16 %v338
    %v371 = vunpack.c.l.b16 %v339
    %v372 = vunpack.c.l.b16 %v340
    %v373 = vunpack.c.l.b16 %v341
    %v374 = vpack.c.b16 %v359, %v358
    %v375 = vpack.c.b16 %v361, %v360
    %v376 = vpack.c.b16 %v363, %v362
    %v377 = vpack.c.b16 %v365, %v364
    %v378 = vpack.c.b16 %v367, %v366
    %v379 = vpack.c.b16 %v369, %v368
    %v380 = vpack.c.b16 %v371, %v370
    %v381 = vpack.c.b16 %v373, %v372
    %390 = vmatprep.subr.bf16.mxu0 0
    %391 = vmatpush1.bf16.msra.mxu0 %v374
    %392 = vmatprep.subr.bf16.mxu0 0
    %393 = vmatpush1.bf16.msra.mxu0 %v375
    %394 = vmatprep.subr.bf16.mxu0 0
    %395 = vmatpush1.bf16.msra.mxu0 %v376
    %396 = vmatprep.subr.bf16.mxu0 0
    %397 = vmatpush1.bf16.msra.mxu0 %v377
    %398 = vmatprep.subr.bf16.mxu0 0
    %399 = vmatpush1.bf16.msra.mxu0 %v378
    %400 = vmatprep.subr.bf16.mxu0 0
    %401 = vmatpush1.bf16.msra.mxu0 %v379
    %402 = vmatprep.subr.bf16.mxu0 0
    %403 = vmatpush1.bf16.msra.mxu0 %v380
    %404 = vmatprep.subr.bf16.mxu0 0
    %405 = vmatpush1.bf16.msra.mxu0 %v381
    %406 = vmatprep.subr.bf16.mxu0 0
    %407 = vmatpush1.bf16.msra.mxu0 0
    %408 = vmatprep.subr.bf16.mxu0 0
    %409 = vmatpush1.bf16.msra.mxu0 0
    %410 = vmatprep.subr.bf16.mxu0 0
    %411 = vmatpush1.bf16.msra.mxu0 0
    %412 = vmatprep.subr.bf16.mxu0 0
    %413 = vmatpush1.bf16.msra.mxu0 0
    %414 = vmatprep.subr.bf16.mxu0 0
    %415 = vmatpush1.bf16.msra.mxu0 0
    %416 = vmatprep.subr.bf16.mxu0 0
    %417 = vmatpush1.bf16.msra.mxu0 0
    %418 = vmatprep.subr.bf16.mxu0 0
    %419 = vmatpush1.bf16.msra.mxu0 0
    %420 = vmatprep.subr.bf16.mxu0 0
    %421 = vmatpush1.bf16.msra.mxu0 0
    %422 = vmatprep.mubr.bf16.mxu0 0
    %423 = vmatmul.mubr.bf16.gmra.mrb[0].mxu0 %v189
    %v424 = vpop.f32.mrb[0].mxu0
    %v425 = vadd.f32 0.0, %v424
    %v426 = vpop.f32.mrb[0].mxu0
    %v427 = vpop.f32.mrb[0].mxu0
    %v428 = vadd.f32 0.0, %v427
    %v429 = vpop.f32.mrb[0].mxu0
    %430 = vmatprep.mubr.bf16.mxu0 0
    %431 = vmatmul.mubr.bf16.gmra.mrb[0].mxu0 %v190
    %v432 = vpop.f32.mrb[0].mxu0
    %v433 = vadd.f32 0.0, %v432
    %v434 = vpop.f32.mrb[0].mxu0
    %v435 = vpop.f32.mrb[0].mxu0
    %v436 = vadd.f32 0.0, %v435
    %v437 = vpop.f32.mrb[0].mxu0
    %438 = vmatprep.mubr.bf16.mxu0 0
    %439 = vmatmul.mubr.bf16.gmra.mrb[0].mxu0 %v191
    %v440 = vpop.f32.mrb[0].mxu0
    %v441 = vadd.f32 0.0, %v440
    %v442 = vpop.f32.mrb[0].mxu0
    %v443 = vpop.f32.mrb[0].mxu0
    %v444 = vadd.f32 0.0, %v443
    %v445 = vpop.f32.mrb[0].mxu0
    %446 = vmatprep.mubr.bf16.mxu0 0
    %447 = vmatmul.mubr.bf16.gmra.mrb[0].mxu0 %v192
    %v448 = vpop.f32.mrb[0].mxu0
    %v449 = vadd.f32 0.0, %v448
    %v450 = vpop.f32.mrb[0].mxu0
    %v451 = vpop.f32.mrb[0].mxu0
    %v452 = vadd.f32 0.0, %v451
    %v453 = vpop.f32.mrb[0].mxu0
    %454 = vmatprep.mubr.bf16.mxu0 0
    %455 = vmatmul.mubr.bf16.gmra.mrb[0].mxu0 %v193
    %v456 = vpop.f32.mrb[0].mxu0
    %v457 = vadd.f32 0.0, %v456
    %v458 = vpop.f32.mrb[0].mxu0
    %v459 = vpop.f32.mrb[0].mxu0
    %v460 = vadd.f32 0.0, %v459
    %v461 = vpop.f32.mrb[0].mxu0
    %462 = vmatprep.mubr.bf16.mxu0 0
    %463 = vmatmul.mubr.bf16.gmra.mrb[0].mxu0 %v194
    %v464 = vpop.f32.mrb[0].mxu0
    %v465 = vadd.f32 0.0, %v464
    %v466 = vpop.f32.mrb[0].mxu0
    %v467 = vpop.f32.mrb[0].mxu0
    %v468 = vadd.f32 0.0, %v467
    %v469 = vpop.f32.mrb[0].mxu0
    %470 = vmatprep.mubr.bf16.mxu0 0
    %471 = vmatmul.mubr.bf16.gmra.mrb[0].mxu0 %v195
    %v472 = vpop.f32.mrb[0].mxu0
    %v473 = vadd.f32 0.0, %v472
    %v474 = vpop.f32.mrb[0].mxu0
    %v475 = vpop.f32.mrb[0].mxu0
    %v476 = vadd.f32 0.0, %v475
    %v477 = vpop.f32.mrb[0].mxu0
    %478 = vmatprep.mubr.bf16.mxu0 0
    %479 = vmatmul.mubr.bf16.gmra.mrb[0].mxu0 %v196
    %v480 = vpop.f32.mrb[0].mxu0
    %v481 = vadd.f32 0.0, %v480
    %v482 = vpop.f32.mrb[0].mxu0
    %v483 = vpop.f32.mrb[0].mxu0
    %v484 = vadd.f32 0.0, %v483
    %v485 = vpop.f32.mrb[0].mxu0
    %486 = vdwg.mxu0
    %v503 = vunpack.c.l.b16 %v310
    %v504 = vunpack.c.l.b16 %v311
    %v505 = vunpack.c.l.b16 %v312
    %v506 = vunpack.c.l.b16 %v313
    %v507 = vunpack.c.l.b16 %v314
    %v508 = vunpack.c.l.b16 %v315
    %v509 = vunpack.c.l.b16 %v316
    %v510 = vunpack.c.l.b16 %v317
    %v511 = vunpack.c.l.b16 %v318
    %v512 = vunpack.c.l.b16 %v319
    %v513 = vunpack.c.l.b16 %v320
    %v514 = vunpack.c.l.b16 %v321
    %v515 = vunpack.c.l.b16 %v322
    %v516 = vunpack.c.l.b16 %v323
    %v517 = vunpack.c.l.b16 %v324
    %v518 = vunpack.c.l.b16 %v325
    %v519 = vpack.c.b16 %v504, %v503
    %v520 = vpack.c.b16 %v506, %v505
    %v521 = vpack.c.b16 %v508, %v507
    %v522 = vpack.c.b16 %v510, %v509
    %v523 = vpack.c.b16 %v512, %v511
    %v524 = vpack.c.b16 %v514, %v513
    %v525 = vpack.c.b16 %v516, %v515
    %v526 = vpack.c.b16 %v518, %v517
    %535 = vmatprep.subr.bf16.mxu0 0
    %536 = vmatpush1.bf16.msra.mxu0 %v519
    %537 = vmatprep.subr.bf16.mxu0 0
    %538 = vmatpush1.bf16.msra.mxu0 %v520
    %539 = vmatprep.subr.bf16.mxu0 0
    %540 = vmatpush1.bf16.msra.mxu0 %v521
    %541 = vmatprep.subr.bf16.mxu0 0
    %542 = vmatpush1.bf16.msra.mxu0 %v522
    %543 = vmatprep.subr.bf16.mxu0 0
    %544 = vmatpush1.bf16.msra.mxu0 %v523
    %545 = vmatprep.subr.bf16.mxu0 0
    %546 = vmatpush1.bf16.msra.mxu0 %v524
    %547 = vmatprep.subr.bf16.mxu0 0
    %548 = vmatpush1.bf16.msra.mxu0 %v525
    %549 = vmatprep.subr.bf16.mxu0 0
    %550 = vmatpush1.bf16.msra.mxu0 %v526
    %551 = vmatprep.subr.bf16.mxu0 0
    %552 = vmatpush1.bf16.msra.mxu0 0
    %553 = vmatprep.subr.bf16.mxu0 0
    %554 = vmatpush1.bf16.msra.mxu0 0
    %555 = vmatprep.subr.bf16.mxu0 0
    %556 = vmatpush1.bf16.msra.mxu0 0
    %557 = vmatprep.subr.bf16.mxu0 0
    %558 = vmatpush1.bf16.msra.mxu0 0
    %559 = vmatprep.subr.bf16.mxu0 0
    %560 = vmatpush1.bf16.msra.mxu0 0
    %561 = vmatprep.subr.bf16.mxu0 0
    %562 = vmatpush1.bf16.msra.mxu0 0
    %563 = vmatprep.subr.bf16.mxu0 0
    %564 = vmatpush1.bf16.msra.mxu0 0
    %565 = vmatprep.subr.bf16.mxu0 0
    %566 = vmatpush1.bf16.msra.mxu0 0
    %567 = vmatprep.mubr.bf16.mxu0 0
    %568 = vmatmul.mubr.bf16.gmra.mrb[0].mxu0 %v302
    %v569 = vpop.f32.mrb[0].mxu0
    %v570 = vadd.f32 %v425, %v569
    %v571 = vpop.f32.mrb[0].mxu0
    %v572 = vpop.f32.mrb[0].mxu0
    %v573 = vadd.f32 %v428, %v572
    %v574 = vpop.f32.mrb[0].mxu0
    %575 = vmatprep.mubr.bf16.mxu0 0
    %576 = vmatmul.mubr.bf16.gmra.mrb[0].mxu0 %v303
    %v577 = vpop.f32.mrb[0].mxu0
    %v578 = vadd.f32 %v433, %v577
    %v579 = vpop.f32.mrb[0].mxu0
    %v580 = vpop.f32.mrb[0].mxu0
    %v581 = vadd.f32 %v436, %v580
    %v582 = vpop.f32.mrb[0].mxu0
    %583 = vmatprep.mubr.bf16.mxu0 0
    %584 = vmatmul.mubr.bf16.gmra.mrb[0].mxu0 %v304
    %v585 = vpop.f32.mrb[0].mxu0
    %v586 = vadd.f32 %v441, %v585
    %v587 = vpop.f32.mrb[0].mxu0
    %v588 = vpop.f32.mrb[0].mxu0
    %v589 = vadd.f32 %v444, %v588
    %v590 = vpop.f32.mrb[0].mxu0
    %591 = vmatprep.mubr.bf16.mxu0 0
    %592 = vmatmul.mubr.bf16.gmra.mrb[0].mxu0 %v305
    %v593 = vpop.f32.mrb[0].mxu0
    %v594 = vadd.f32 %v449, %v593
    %v595 = vpop.f32.mrb[0].mxu0
    %v596 = vpop.f32.mrb[0].mxu0
    %v597 = vadd.f32 %v452, %v596
    %v598 = vpop.f32.mrb[0].mxu0
    %599 = vmatprep.mubr.bf16.mxu0 0
    %600 = vmatmul.mubr.bf16.gmra.mrb[0].mxu0 %v306
    %v601 = vpop.f32.mrb[0].mxu0
    %v602 = vadd.f32 %v457, %v601
    %v603 = vpop.f32.mrb[0].mxu0
    %v604 = vpop.f32.mrb[0].mxu0
    %v605 = vadd.f32 %v460, %v604
    %v606 = vpop.f32.mrb[0].mxu0
    %607 = vmatprep.mubr.bf16.mxu0 0
    %608 = vmatmul.mubr.bf16.gmra.mrb[0].mxu0 %v307
    %v609 = vpop.f32.mrb[0].mxu0
    %v610 = vadd.f32 %v465, %v609
    %v611 = vpop.f32.mrb[0].mxu0
    %v612 = vpop.f32.mrb[0].mxu0
    %v613 = vadd.f32 %v468, %v612
    %v614 = vpop.f32.mrb[0].mxu0
    %615 = vmatprep.mubr.bf16.mxu0 0
    %616 = vmatmul.mubr.bf16.gmra.mrb[0].mxu0 %v308
    %v617 = vpop.f32.mrb[0].mxu0
    %v618 = vadd.f32 %v473, %v617
    %v619 = vpop.f32.mrb[0].mxu0
    %v620 = vpop.f32.mrb[0].mxu0
    %v621 = vadd.f32 %v476, %v620
    %v622 = vpop.f32.mrb[0].mxu0
    %623 = vmatprep.mubr.bf16.mxu0 0
    %624 = vmatmul.mubr.bf16.gmra.mrb[0].mxu0 %v309
    %v625 = vpop.f32.mrb[0].mxu0
    %v626 = vadd.f32 %v481, %v625
    %v627 = vpop.f32.mrb[0].mxu0
    %v628 = vpop.f32.mrb[0].mxu0
    %v629 = vadd.f32 %v484, %v628
    %v630 = vpop.f32.mrb[0].mxu0
    %631 = vdwg.mxu0
    %v632 = vld [vmem:[%s4] sm:$0x1]
    %v634 = vlaneseq
    %v635 = vshrl.u32 %v634, 7
    %v636 = vsub.s32 0, %v635
    %v637 = vrot.slane %v632, %v636
    %v639 = vadd.f32 %v570, %v637
    %v640 = vadd.f32 %v573, %v637
    %v641 = vadd.f32 %v578, %v637
    %v642 = vadd.f32 %v581, %v637
    %v643 = vadd.f32 %v586, %v637
    %v644 = vadd.f32 %v589, %v637
    %v645 = vadd.f32 %v594, %v637
    %v646 = vadd.f32 %v597, %v637
    %v647 = vadd.f32 %v602, %v637
    %v648 = vadd.f32 %v605, %v637
    %v649 = vadd.f32 %v610, %v637
    %v650 = vadd.f32 %v613, %v637
    %v651 = vadd.f32 %v618, %v637
    %v652 = vadd.f32 %v621, %v637
    %v653 = vadd.f32 %v626, %v637
    %v654 = vadd.f32 %v629, %v637
    %v655 = vmax.f32 %v639, 0.0
    %v656 = vmax.f32 %v640, 0.0
    %v657 = vmax.f32 %v641, 0.0
    %v658 = vmax.f32 %v642, 0.0
    %v659 = vmax.f32 %v643, 0.0
    %v660 = vmax.f32 %v644, 0.0
    %v661 = vmax.f32 %v645, 0.0
    %v662 = vmax.f32 %v646, 0.0
    %v663 = vmax.f32 %v647, 0.0
    %v664 = vmax.f32 %v648, 0.0
    %v665 = vmax.f32 %v649, 0.0
    %v666 = vmax.f32 %v650, 0.0
    %v667 = vmax.f32 %v651, 0.0
    %v668 = vmax.f32 %v652, 0.0
    %v669 = vmax.f32 %v653, 0.0
    %v670 = vmax.f32 %v654, 0.0
    %v671 = vpack.c.bf16 %v656, %v655
    %v672 = vpack.c.bf16 %v658, %v657
    %v673 = vpack.c.bf16 %v660, %v659
    %v674 = vpack.c.bf16 %v662, %v661
    %v675 = vpack.c.bf16 %v664, %v663
    %v676 = vpack.c.bf16 %v666, %v665
    %v677 = vpack.c.bf16 %v668, %v667
    %v678 = vpack.c.bf16 %v670, %v669
    %679 = vmatprep.subr.bf16.mxu0 0
    %680 = vmatpush1.bf16.msra.mxu0 %v671
    %681 = vmatprep.subr.bf16.mxu0 0
    %682 = vmatpush1.bf16.msra.mxu0 %v672
    %683 = vmatprep.subr.bf16.mxu0 0
    %684 = vmatpush1.bf16.msra.mxu0 %v673
    %685 = vmatprep.subr.bf16.mxu0 0
    %686 = vmatpush1.bf16.msra.mxu0 %v674
    %687 = vmatprep.subr.bf16.mxu0 0
    %688 = vmatpush1.bf16.msra.mxu0 %v675
    %689 = vmatprep.subr.bf16.mxu0 0
    %690 = vmatpush1.bf16.msra.mxu0 %v676
    %691 = vmatprep.subr.bf16.mxu0 0
    %692 = vmatpush1.bf16.msra.mxu0 %v677
    %693 = vmatprep.subr.bf16.mxu0 0
    %694 = vmatpush1.bf16.msra.mxu0 %v678
    %695 = vmatprep.subr.bf16.mxu0 0
    %696 = vmatpush1.bf16.msra.mxu0 0
    %697 = vmatprep.subr.bf16.mxu0 0
    %698 = vmatpush1.bf16.msra.mxu0 0
    %699 = vmatprep.subr.bf16.mxu0 0
    %700 = vmatpush1.bf16.msra.mxu0 0
    %701 = vmatprep.subr.bf16.mxu0 0
    %702 = vmatpush1.bf16.msra.mxu0 0
    %703 = vmatprep.subr.bf16.mxu0 0
    %704 = vmatpush1.bf16.msra.mxu0 0
    %705 = vmatprep.subr.bf16.mxu0 0
    %706 = vmatpush1.bf16.msra.mxu0 0
    %707 = vmatprep.subr.bf16.mxu0 0
    %708 = vmatpush1.bf16.msra.mxu0 0
    %709 = vmatprep.subr.bf16.mxu0 0
    %710 = vmatpush1.bf16.msra.mxu0 0
    %711 = vmatprep.mubr.bf16.mxu0 0
    %712 = vmatmul.mubr.bf16.gmra.mrb[0].mxu0 %v141
    %v713 = vpop.f32.mrb[0].mxu0
    %v714 = vadd.f32 0.0, %v713
    %v715 = vpop.f32.mrb[0].mxu0
    %v716 = vpop.f32.mrb[0].mxu0
    %v717 = vadd.f32 0.0, %v716
    %v718 = vpop.f32.mrb[0].mxu0
    %719 = vmatprep.mubr.bf16.mxu0 0
    %720 = vmatmul.mubr.bf16.gmra.mrb[0].mxu0 %v142
    %v721 = vpop.f32.mrb[0].mxu0
    %v722 = vadd.f32 0.0, %v721
    %v723 = vpop.f32.mrb[0].mxu0
    %v724 = vpop.f32.mrb[0].mxu0
    %v725 = vadd.f32 0.0, %v724
    %v726 = vpop.f32.mrb[0].mxu0
    %727 = vmatprep.mubr.bf16.mxu0 0
    %728 = vmatmul.mubr.bf16.gmra.mrb[0].mxu0 %v143
    %v729 = vpop.f32.mrb[0].mxu0
    %v730 = vadd.f32 0.0, %v729
    %v731 = vpop.f32.mrb[0].mxu0
    %v732 = vpop.f32.mrb[0].mxu0
    %v733 = vadd.f32 0.0, %v732
    %v734 = vpop.f32.mrb[0].mxu0
    %735 = vmatprep.mubr.bf16.mxu0 0
    %736 = vmatmul.mubr.bf16.gmra.mrb[0].mxu0 %v144
    %v737 = vpop.f32.mrb[0].mxu0
    %v738 = vadd.f32 0.0, %v737
    %v739 = vpop.f32.mrb[0].mxu0
    %v740 = vpop.f32.mrb[0].mxu0
    %v741 = vadd.f32 0.0, %v740
    %v742 = vpop.f32.mrb[0].mxu0
    %743 = vmatprep.mubr.bf16.mxu0 0
    %744 = vmatmul.mubr.bf16.gmra.mrb[0].mxu0 %v145
    %v745 = vpop.f32.mrb[0].mxu0
    %v746 = vadd.f32 0.0, %v745
    %v747 = vpop.f32.mrb[0].mxu0
    %v748 = vpop.f32.mrb[0].mxu0
    %v749 = vadd.f32 0.0, %v748
    %v750 = vpop.f32.mrb[0].mxu0
    %751 = vmatprep.mubr.bf16.mxu0 0
    %752 = vmatmul.mubr.bf16.gmra.mrb[0].mxu0 %v146
    %v753 = vpop.f32.mrb[0].mxu0
    %v754 = vadd.f32 0.0, %v753
    %v755 = vpop.f32.mrb[0].mxu0
    %v756 = vpop.f32.mrb[0].mxu0
    %v757 = vadd.f32 0.0, %v756
    %v758 = vpop.f32.mrb[0].mxu0
    %759 = vmatprep.mubr.bf16.mxu0 0
    %760 = vmatmul.mubr.bf16.gmra.mrb[0].mxu0 %v147
    %v761 = vpop.f32.mrb[0].mxu0
    %v762 = vadd.f32 0.0, %v761
    %v763 = vpop.f32.mrb[0].mxu0
    %v764 = vpop.f32.mrb[0].mxu0
    %v765 = vadd.f32 0.0, %v764
    %v766 = vpop.f32.mrb[0].mxu0
    %767 = vmatprep.mubr.bf16.mxu0 0
    %768 = vmatmul.mubr.bf16.gmra.mrb[0].mxu0 %v148
    %v769 = vpop.f32.mrb[0].mxu0
    %v770 = vadd.f32 0.0, %v769
    %v771 = vpop.f32.mrb[0].mxu0
    %v772 = vpop.f32.mrb[0].mxu0
    %v773 = vadd.f32 0.0, %v772
    %v774 = vpop.f32.mrb[0].mxu0
    %775 = vdwg.mxu0
    %v776 = vpack.c.bf16 %v717, %v714
    %v777 = vpack.c.bf16 %v725, %v722
    %v778 = vpack.c.bf16 %v733, %v730
    %v779 = vpack.c.bf16 %v741, %v738
    %v780 = vpack.c.bf16 %v749, %v746
    %v781 = vpack.c.bf16 %v757, %v754
    %v782 = vpack.c.bf16 %v765, %v762
    %v783 = vpack.c.bf16 %v773, %v770
    %s784 = scalar_lea.vmem [#allocation7], 64
    %v785 = vld [vmem:[%s784] sm:$0xf]
    %v786 = vld [vmem:[%s784 + $0x4] sm:$0xf]
    %v787 = vld [vmem:[%s784 + $0x8] sm:$0xf]
    %v788 = vld [vmem:[%s784 + $0xc] sm:$0xf]
    %v789 = vld [vmem:[%s784 + $0x10] sm:$0xf]
    %v790 = vld [vmem:[%s784 + $0x14] sm:$0xf]
    %v791 = vld [vmem:[%s784 + $0x18] sm:$0xf]
    %v792 = vld [vmem:[%s784 + $0x1c] sm:$0xf]
    %v793 = vld [vmem:[%s784 + $0x20] sm:$0xf]
    %v794 = vld [vmem:[%s784 + $0x24] sm:$0xf]
    %v795 = vld [vmem:[%s784 + $0x28] sm:$0xf]
    %v796 = vld [vmem:[%s784 + $0x2c] sm:$0xf]
    %v797 = vld [vmem:[%s784 + $0x30] sm:$0xf]
    %v798 = vld [vmem:[%s784 + $0x34] sm:$0xf]
    %v799 = vld [vmem:[%s784 + $0x38] sm:$0xf]
    %v800 = vld [vmem:[%s784 + $0x3c] sm:$0xf]
    %s801 = scalar_lea.vmem [#allocation8], 64
    %v802 = vld [vmem:[%s801] sm:$0xf]
    %v803 = vld [vmem:[%s801 + $0x4] sm:$0xf]
    %v804 = vld [vmem:[%s801 + $0x8] sm:$0xf]
    %v805 = vld [vmem:[%s801 + $0xc] sm:$0xf]
    %v806 = vld [vmem:[%s801 + $0x10] sm:$0xf]
    %v807 = vld [vmem:[%s801 + $0x14] sm:$0xf]
    %v808 = vld [vmem:[%s801 + $0x18] sm:$0xf]
    %v809 = vld [vmem:[%s801 + $0x1c] sm:$0xf]
    %v810 = vld [vmem:[%s801 + $0x20] sm:$0xf]
    %v811 = vld [vmem:[%s801 + $0x24] sm:$0xf]
    %v812 = vld [vmem:[%s801 + $0x28] sm:$0xf]
    %v813 = vld [vmem:[%s801 + $0x2c] sm:$0xf]
    %v814 = vld [vmem:[%s801 + $0x30] sm:$0xf]
    %v815 = vld [vmem:[%s801 + $0x34] sm:$0xf]
    %v816 = vld [vmem:[%s801 + $0x38] sm:$0xf]
    %v817 = vld [vmem:[%s801 + $0x3c] sm:$0xf]
    %v834 = vunpack.c.l.b16 %v802
    %v835 = vunpack.c.l.b16 %v803
    %v836 = vunpack.c.l.b16 %v804
    %v837 = vunpack.c.l.b16 %v805
    %v838 = vunpack.c.l.b16 %v806
    %v839 = vunpack.c.l.b16 %v807
    %v840 = vunpack.c.l.b16 %v808
    %v841 = vunpack.c.l.b16 %v809
    %v842 = vunpack.c.l.b16 %v810
    %v843 = vunpack.c.l.b16 %v811
    %v844 = vunpack.c.l.b16 %v812
    %v845 = vunpack.c.l.b16 %v813
    %v846 = vunpack.c.l.b16 %v814
    %v847 = vunpack.c.l.b16 %v815
    %v848 = vunpack.c.l.b16 %v816
    %v849 = vunpack.c.l.b16 %v817
    %v850 = vpack.c.b16 %v835, %v834
    %v851 = vpack.c.b16 %v837, %v836
    %v852 = vpack.c.b16 %v839, %v838
    %v853 = vpack.c.b16 %v841, %v840
    %v854 = vpack.c.b16 %v843, %v842
    %v855 = vpack.c.b16 %v845, %v844
    %v856 = vpack.c.b16 %v847, %v846
    %v857 = vpack.c.b16 %v849, %v848
    %866 = vmatprep.subr.bf16.mxu0 0
    %867 = vmatpush1.bf16.msra.mxu0 %v850
    %868 = vmatprep.subr.bf16.mxu0 0
    %869 = vmatpush1.bf16.msra.mxu0 %v851
    %870 = vmatprep.subr.bf16.mxu0 0
    %871 = vmatpush1.bf16.msra.mxu0 %v852
    %872 = vmatprep.subr.bf16.mxu0 0
    %873 = vmatpush1.bf16.msra.mxu0 %v853
    %874 = vmatprep.subr.bf16.mxu0 0
    %875 = vmatpush1.bf16.msra.mxu0 %v854
    %876 = vmatprep.subr.bf16.mxu0 0
    %877 = vmatpush1.bf16.msra.mxu0 %v855
    %878 = vmatprep.subr.bf16.mxu0 0
    %879 = vmatpush1.bf16.msra.mxu0 %v856
    %880 = vmatprep.subr.bf16.mxu0 0
    %881 = vmatpush1.bf16.msra.mxu0 %v857
    %882 = vmatprep.subr.bf16.mxu0 0
    %883 = vmatpush1.bf16.msra.mxu0 0
    %884 = vmatprep.subr.bf16.mxu0 0
    %885 = vmatpush1.bf16.msra.mxu0 0
    %886 = vmatprep.subr.bf16.mxu0 0
    %887 = vmatpush1.bf16.msra.mxu0 0
    %888 = vmatprep.subr.bf16.mxu0 0
    %889 = vmatpush1.bf16.msra.mxu0 0
    %890 = vmatprep.subr.bf16.mxu0 0
    %891 = vmatpush1.bf16.msra.mxu0 0
    %892 = vmatprep.subr.bf16.mxu0 0
    %893 = vmatpush1.bf16.msra.mxu0 0
    %894 = vmatprep.subr.bf16.mxu0 0
    %895 = vmatpush1.bf16.msra.mxu0 0
    %896 = vmatprep.subr.bf16.mxu0 0
    %897 = vmatpush1.bf16.msra.mxu0 0
    %898 = vmatprep.mubr.bf16.mxu0 0
    %899 = vmatmul.mubr.bf16.gmra.mrb[0].mxu0 %v671
    %v900 = vpop.f32.mrb[0].mxu0
    %v901 = vadd.f32 0.0, %v900
    %v902 = vpop.f32.mrb[0].mxu0
    %v903 = vpop.f32.mrb[0].mxu0
    %v904 = vadd.f32 0.0, %v903
    %v905 = vpop.f32.mrb[0].mxu0
    %906 = vmatprep.mubr.bf16.mxu0 0
    %907 = vmatmul.mubr.bf16.gmra.mrb[0].mxu0 %v672
    %v908 = vpop.f32.mrb[0].mxu0
    %v909 = vadd.f32 0.0, %v908
    %v910 = vpop.f32.mrb[0].mxu0
    %v911 = vpop.f32.mrb[0].mxu0
    %v912 = vadd.f32 0.0, %v911
    %v913 = vpop.f32.mrb[0].mxu0
    %914 = vmatprep.mubr.bf16.mxu0 0
    %915 = vmatmul.mubr.bf16.gmra.mrb[0].mxu0 %v673
    %v916 = vpop.f32.mrb[0].mxu0
    %v917 = vadd.f32 0.0, %v916
    %v918 = vpop.f32.mrb[0].mxu0
    %v919 = vpop.f32.mrb[0].mxu0
    %v920 = vadd.f32 0.0, %v919
    %v921 = vpop.f32.mrb[0].mxu0
    %922 = vmatprep.mubr.bf16.mxu0 0
    %923 = vmatmul.mubr.bf16.gmra.mrb[0].mxu0 %v674
    %v924 = vpop.f32.mrb[0].mxu0
    %v925 = vadd.f32 0.0, %v924
    %v926 = vpop.f32.mrb[0].mxu0
    %v927 = vpop.f32.mrb[0].mxu0
    %v928 = vadd.f32 0.0, %v927
    %v929 = vpop.f32.mrb[0].mxu0
    %930 = vmatprep.mubr.bf16.mxu0 0
    %931 = vmatmul.mubr.bf16.gmra.mrb[0].mxu0 %v675
    %v932 = vpop.f32.mrb[0].mxu0
    %v933 = vadd.f32 0.0, %v932
    %v934 = vpop.f32.mrb[0].mxu0
    %v935 = vpop.f32.mrb[0].mxu0
    %v936 = vadd.f32 0.0, %v935
    %v937 = vpop.f32.mrb[0].mxu0
    %938 = vmatprep.mubr.bf16.mxu0 0
    %939 = vmatmul.mubr.bf16.gmra.mrb[0].mxu0 %v676
    %v940 = vpop.f32.mrb[0].mxu0
    %v941 = vadd.f32 0.0, %v940
    %v942 = vpop.f32.mrb[0].mxu0
    %v943 = vpop.f32.mrb[0].mxu0
    %v944 = vadd.f32 0.0, %v943
    %v945 = vpop.f32.mrb[0].mxu0
    %946 = vmatprep.mubr.bf16.mxu0 0
    %947 = vmatmul.mubr.bf16.gmra.mrb[0].mxu0 %v677
    %v948 = vpop.f32.mrb[0].mxu0
    %v949 = vadd.f32 0.0, %v948
    %v950 = vpop.f32.mrb[0].mxu0
    %v951 = vpop.f32.mrb[0].mxu0
    %v952 = vadd.f32 0.0, %v951
    %v953 = vpop.f32.mrb[0].mxu0
    %954 = vmatprep.mubr.bf16.mxu0 0
    %955 = vmatmul.mubr.bf16.gmra.mrb[0].mxu0 %v678
    %v956 = vpop.f32.mrb[0].mxu0
    %v957 = vadd.f32 0.0, %v956
    %v958 = vpop.f32.mrb[0].mxu0
    %v959 = vpop.f32.mrb[0].mxu0
    %v960 = vadd.f32 0.0, %v959
    %v961 = vpop.f32.mrb[0].mxu0
    %962 = vdwg.mxu0
    %v979 = vunpack.c.l.b16 %v785
    %v980 = vunpack.c.l.b16 %v786
    %v981 = vunpack.c.l.b16 %v787
    %v982 = vunpack.c.l.b16 %v788
    %v983 = vunpack.c.l.b16 %v789
    %v984 = vunpack.c.l.b16 %v790
    %v985 = vunpack.c.l.b16 %v791
    %v986 = vunpack.c.l.b16 %v792
    %v987 = vunpack.c.l.b16 %v793
    %v988 = vunpack.c.l.b16 %v794
    %v989 = vunpack.c.l.b16 %v795
    %v990 = vunpack.c.l.b16 %v796
    %v991 = vunpack.c.l.b16 %v797
    %v992 = vunpack.c.l.b16 %v798
    %v993 = vunpack.c.l.b16 %v799
    %v994 = vunpack.c.l.b16 %v800
    %v995 = vpack.c.b16 %v980, %v979
    %v996 = vpack.c.b16 %v982, %v981
    %v997 = vpack.c.b16 %v984, %v983
    %v998 = vpack.c.b16 %v986, %v985
    %v999 = vpack.c.b16 %v988, %v987
    %v1000 = vpack.c.b16 %v990, %v989
    %v1001 = vpack.c.b16 %v992, %v991
    %v1002 = vpack.c.b16 %v994, %v993
    %1011 = vmatprep.subr.bf16.mxu0 0
    %1012 = vmatpush1.bf16.msra.mxu0 %v995
    %1013 = vmatprep.subr.bf16.mxu0 0
    %1014 = vmatpush1.bf16.msra.mxu0 %v996
    %1015 = vmatprep.subr.bf16.mxu0 0
    %1016 = vmatpush1.bf16.msra.mxu0 %v997
    %1017 = vmatprep.subr.bf16.mxu0 0
    %1018 = vmatpush1.bf16.msra.mxu0 %v998
    %1019 = vmatprep.subr.bf16.mxu0 0
    %1020 = vmatpush1.bf16.msra.mxu0 %v999
    %1021 = vmatprep.subr.bf16.mxu0 0
    %1022 = vmatpush1.bf16.msra.mxu0 %v1000
    %1023 = vmatprep.subr.bf16.mxu0 0
    %1024 = vmatpush1.bf16.msra.mxu0 %v1001
    %1025 = vmatprep.subr.bf16.mxu0 0
    %1026 = vmatpush1.bf16.msra.mxu0 %v1002
    %1027 = vmatprep.subr.bf16.mxu0 0
    %1028 = vmatpush1.bf16.msra.mxu0 0
    %1029 = vmatprep.subr.bf16.mxu0 0
    %1030 = vmatpush1.bf16.msra.mxu0 0
    %1031 = vmatprep.subr.bf16.mxu0 0
    %1032 = vmatpush1.bf16.msra.mxu0 0
    %1033 = vmatprep.subr.bf16.mxu0 0
    %1034 = vmatpush1.bf16.msra.mxu0 0
    %1035 = vmatprep.subr.bf16.mxu0 0
    %1036 = vmatpush1.bf16.msra.mxu0 0
    %1037 = vmatprep.subr.bf16.mxu0 0
    %1038 = vmatpush1.bf16.msra.mxu0 0
    %1039 = vmatprep.subr.bf16.mxu0 0
    %1040 = vmatpush1.bf16.msra.mxu0 0
    %1041 = vmatprep.subr.bf16.mxu0 0
    %1042 = vmatpush1.bf16.msra.mxu0 0
    %1043 = vmatprep.mubr.bf16.mxu0 0
    %1044 = vmatmul.mubr.bf16.gmra.mrb[0].mxu0 %v776
    %v1045 = vpop.f32.mrb[0].mxu0
    %v1046 = vadd.f32 %v901, %v1045
    %v1047 = vpop.f32.mrb[0].mxu0
    %v1048 = vpop.f32.mrb[0].mxu0
    %v1049 = vadd.f32 %v904, %v1048
    %v1050 = vpop.f32.mrb[0].mxu0
    %1051 = vmatprep.mubr.bf16.mxu0 0
    %1052 = vmatmul.mubr.bf16.gmra.mrb[0].mxu0 %v777
    %v1053 = vpop.f32.mrb[0].mxu0
    %v1054 = vadd.f32 %v909, %v1053
    %v1055 = vpop.f32.mrb[0].mxu0
    %v1056 = vpop.f32.mrb[0].mxu0
    %v1057 = vadd.f32 %v912, %v1056
    %v1058 = vpop.f32.mrb[0].mxu0
    %1059 = vmatprep.mubr.bf16.mxu0 0
    %1060 = vmatmul.mubr.bf16.gmra.mrb[0].mxu0 %v778
    %v1061 = vpop.f32.mrb[0].mxu0
    %v1062 = vadd.f32 %v917, %v1061
    %v1063 = vpop.f32.mrb[0].mxu0
    %v1064 = vpop.f32.mrb[0].mxu0
    %v1065 = vadd.f32 %v920, %v1064
    %v1066 = vpop.f32.mrb[0].mxu0
    %1067 = vmatprep.mubr.bf16.mxu0 0
    %1068 = vmatmul.mubr.bf16.gmra.mrb[0].mxu0 %v779
    %v1069 = vpop.f32.mrb[0].mxu0
    %v1070 = vadd.f32 %v925, %v1069
    %v1071 = vpop.f32.mrb[0].mxu0
    %v1072 = vpop.f32.mrb[0].mxu0
    %v1073 = vadd.f32 %v928, %v1072
    %v1074 = vpop.f32.mrb[0].mxu0
    %1075 = vmatprep.mubr.bf16.mxu0 0
    %1076 = vmatmul.mubr.bf16.gmra.mrb[0].mxu0 %v780
    %v1077 = vpop.f32.mrb[0].mxu0
    %v1078 = vadd.f32 %v933, %v1077
    %v1079 = vpop.f32.mrb[0].mxu0
    %v1080 = vpop.f32.mrb[0].mxu0
    %v1081 = vadd.f32 %v936, %v1080
    %v1082 = vpop.f32.mrb[0].mxu0
    %1083 = vmatprep.mubr.bf16.mxu0 0
    %1084 = vmatmul.mubr.bf16.gmra.mrb[0].mxu0 %v781
    %v1085 = vpop.f32.mrb[0].mxu0
    %v1086 = vadd.f32 %v941, %v1085
    %v1087 = vpop.f32.mrb[0].mxu0
    %v1088 = vpop.f32.mrb[0].mxu0
    %v1089 = vadd.f32 %v944, %v1088
    %v1090 = vpop.f32.mrb[0].mxu0
    %1091 = vmatprep.mubr.bf16.mxu0 0
    %1092 = vmatmul.mubr.bf16.gmra.mrb[0].mxu0 %v782
    %v1093 = vpop.f32.mrb[0].mxu0
    %v1094 = vadd.f32 %v949, %v1093
    %v1095 = vpop.f32.mrb[0].mxu0
    %v1096 = vpop.f32.mrb[0].mxu0
    %v1097 = vadd.f32 %v952, %v1096
    %v1098 = vpop.f32.mrb[0].mxu0
    %1099 = vmatprep.mubr.bf16.mxu0 0
    %1100 = vmatmul.mubr.bf16.gmra.mrb[0].mxu0 %v783
    %v1101 = vpop.f32.mrb[0].mxu0
    %v1102 = vadd.f32 %v957, %v1101
    %v1103 = vpop.f32.mrb[0].mxu0
    %v1104 = vpop.f32.mrb[0].mxu0
    %v1105 = vadd.f32 %v960, %v1104
    %v1106 = vpop.f32.mrb[0].mxu0
    %1107 = vdwg.mxu0
    %s1108 = scalar_lea.vmem %s4, 1
    %v1109 = vld [vmem:[%s1108] sm:$0x1]
    %v1111 = vlaneseq
    %v1112 = vshrl.u32 %v1111, 7
    %v1113 = vsub.s32 0, %v1112
    %v1114 = vrot.slane %v1109, %v1113
    %v1116 = vadd.f32 %v1046, %v1114
    %v1117 = vadd.f32 %v1049, %v1114
    %v1118 = vadd.f32 %v1054, %v1114
    %v1119 = vadd.f32 %v1057, %v1114
    %v1120 = vadd.f32 %v1062, %v1114
    %v1121 = vadd.f32 %v1065, %v1114
    %v1122 = vadd.f32 %v1070, %v1114
    %v1123 = vadd.f32 %v1073, %v1114
    %v1124 = vadd.f32 %v1078, %v1114
    %v1125 = vadd.f32 %v1081, %v1114
    %v1126 = vadd.f32 %v1086, %v1114
    %v1127 = vadd.f32 %v1089, %v1114
    %v1128 = vadd.f32 %v1094, %v1114
    %v1129 = vadd.f32 %v1097, %v1114
    %v1130 = vadd.f32 %v1102, %v1114
    %v1131 = vadd.f32 %v1105, %v1114
    %v1132 = vmax.f32 %v1116, 0.0
    %v1133 = vmax.f32 %v1117, 0.0
    %v1134 = vmax.f32 %v1118, 0.0
    %v1135 = vmax.f32 %v1119, 0.0
    %v1136 = vmax.f32 %v1120, 0.0
    %v1137 = vmax.f32 %v1121, 0.0
    %v1138 = vmax.f32 %v1122, 0.0
    %v1139 = vmax.f32 %v1123, 0.0
    %v1140 = vmax.f32 %v1124, 0.0
    %v1141 = vmax.f32 %v1125, 0.0
    %v1142 = vmax.f32 %v1126, 0.0
    %v1143 = vmax.f32 %v1127, 0.0
    %v1144 = vmax.f32 %v1128, 0.0
    %v1145 = vmax.f32 %v1129, 0.0
    %v1146 = vmax.f32 %v1130, 0.0
    %v1147 = vmax.f32 %v1131, 0.0
    %v1148 = vpack.c.bf16 %v1133, %v1132
    %v1149 = vpack.c.bf16 %v1135, %v1134
    %v1150 = vpack.c.bf16 %v1137, %v1136
    %v1151 = vpack.c.bf16 %v1139, %v1138
    %v1152 = vpack.c.bf16 %v1141, %v1140
    %v1153 = vpack.c.bf16 %v1143, %v1142
    %v1154 = vpack.c.bf16 %v1145, %v1144
    %v1155 = vpack.c.bf16 %v1147, %v1146
    %1156 = vmatprep.subr.bf16.mxu0 0
    %1157 = vmatpush1.bf16.msra.mxu0 %v1148
    %1158 = vmatprep.subr.bf16.mxu0 0
    %1159 = vmatpush1.bf16.msra.mxu0 %v1149
    %1160 = vmatprep.subr.bf16.mxu0 0
    %1161 = vmatpush1.bf16.msra.mxu0 %v1150
    %1162 = vmatprep.subr.bf16.mxu0 0
    %1163 = vmatpush1.bf16.msra.mxu0 %v1151
    %1164 = vmatprep.subr.bf16.mxu0 0
    %1165 = vmatpush1.bf16.msra.mxu0 %v1152
    %1166 = vmatprep.subr.bf16.mxu0 0
    %1167 = vmatpush1.bf16.msra.mxu0 %v1153
    %1168 = vmatprep.subr.bf16.mxu0 0
    %1169 = vmatpush1.bf16.msra.mxu0 %v1154
    %1170 = vmatprep.subr.bf16.mxu0 0
    %1171 = vmatpush1.bf16.msra.mxu0 %v1155
    %1172 = vmatprep.subr.bf16.mxu0 0
    %1173 = vmatpush1.bf16.msra.mxu0 0
    %1174 = vmatprep.subr.bf16.mxu0 0
    %1175 = vmatpush1.bf16.msra.mxu0 0
    %1176 = vmatprep.subr.bf16.mxu0 0
    %1177 = vmatpush1.bf16.msra.mxu0 0
    %1178 = vmatprep.subr.bf16.mxu0 0
    %1179 = vmatpush1.bf16.msra.mxu0 0
    %1180 = vmatprep.subr.bf16.mxu0 0
    %1181 = vmatpush1.bf16.msra.mxu0 0
    %1182 = vmatprep.subr.bf16.mxu0 0
    %1183 = vmatpush1.bf16.msra.mxu0 0
    %1184 = vmatprep.subr.bf16.mxu0 0
    %1185 = vmatpush1.bf16.msra.mxu0 0
    %1186 = vmatprep.subr.bf16.mxu0 0
    %1187 = vmatpush1.bf16.msra.mxu0 0
    %1188 = vmatprep.mubr.bf16.mxu0 0
    %1189 = vmatmul.mubr.bf16.gmra.mrb[0].mxu0 %v141
    %v1190 = vpop.f32.mrb[0].mxu0
    %v1191 = vadd.f32 0.0, %v1190
    %v1192 = vpop.f32.mrb[0].mxu0
    %v1193 = vpop.f32.mrb[0].mxu0
    %v1194 = vadd.f32 0.0, %v1193
    %v1195 = vpop.f32.mrb[0].mxu0
    %1196 = vmatprep.mubr.bf16.mxu0 0
    %1197 = vmatmul.mubr.bf16.gmra.mrb[0].mxu0 %v142
    %v1198 = vpop.f32.mrb[0].mxu0
    %v1199 = vadd.f32 0.0, %v1198
    %v1200 = vpop.f32.mrb[0].mxu0
    %v1201 = vpop.f32.mrb[0].mxu0
    %v1202 = vadd.f32 0.0, %v1201
    %v1203 = vpop.f32.mrb[0].mxu0
    %1204 = vmatprep.mubr.bf16.mxu0 0
    %1205 = vmatmul.mubr.bf16.gmra.mrb[0].mxu0 %v143
    %v1206 = vpop.f32.mrb[0].mxu0
    %v1207 = vadd.f32 0.0, %v1206
    %v1208 = vpop.f32.mrb[0].mxu0
    %v1209 = vpop.f32.mrb[0].mxu0
    %v1210 = vadd.f32 0.0, %v1209
    %v1211 = vpop.f32.mrb[0].mxu0
    %1212 = vmatprep.mubr.bf16.mxu0 0
    %1213 = vmatmul.mubr.bf16.gmra.mrb[0].mxu0 %v144
    %v1214 = vpop.f32.mrb[0].mxu0
    %v1215 = vadd.f32 0.0, %v1214
    %v1216 = vpop.f32.mrb[0].mxu0
    %v1217 = vpop.f32.mrb[0].mxu0
    %v1218 = vadd.f32 0.0, %v1217
    %v1219 = vpop.f32.mrb[0].mxu0
    %1220 = vmatprep.mubr.bf16.mxu0 0
    %1221 = vmatmul.mubr.bf16.gmra.mrb[0].mxu0 %v145
    %v1222 = vpop.f32.mrb[0].mxu0
    %v1223 = vadd.f32 0.0, %v1222
    %v1224 = vpop.f32.mrb[0].mxu0
    %v1225 = vpop.f32.mrb[0].mxu0
    %v1226 = vadd.f32 0.0, %v1225
    %v1227 = vpop.f32.mrb[0].mxu0
    %1228 = vmatprep.mubr.bf16.mxu0 0
    %1229 = vmatmul.mubr.bf16.gmra.mrb[0].mxu0 %v146
    %v1230 = vpop.f32.mrb[0].mxu0
    %v1231 = vadd.f32 0.0, %v1230
    %v1232 = vpop.f32.mrb[0].mxu0
    %v1233 = vpop.f32.mrb[0].mxu0
    %v1234 = vadd.f32 0.0, %v1233
    %v1235 = vpop.f32.mrb[0].mxu0
    %1236 = vmatprep.mubr.bf16.mxu0 0
    %1237 = vmatmul.mubr.bf16.gmra.mrb[0].mxu0 %v147
    %v1238 = vpop.f32.mrb[0].mxu0
    %v1239 = vadd.f32 0.0, %v1238
    %v1240 = vpop.f32.mrb[0].mxu0
    %v1241 = vpop.f32.mrb[0].mxu0
    %v1242 = vadd.f32 0.0, %v1241
    %v1243 = vpop.f32.mrb[0].mxu0
    %1244 = vmatprep.mubr.bf16.mxu0 0
    %1245 = vmatmul.mubr.bf16.gmra.mrb[0].mxu0 %v148
    %v1246 = vpop.f32.mrb[0].mxu0
    %v1247 = vadd.f32 0.0, %v1246
    %v1248 = vpop.f32.mrb[0].mxu0
    %v1249 = vpop.f32.mrb[0].mxu0
    %v1250 = vadd.f32 0.0, %v1249
    %v1251 = vpop.f32.mrb[0].mxu0
    %1252 = vdwg.mxu0
    %v1253 = vpack.c.bf16 %v1194, %v1191
    %v1254 = vpack.c.bf16 %v1202, %v1199
    %v1255 = vpack.c.bf16 %v1210, %v1207
    %v1256 = vpack.c.bf16 %v1218, %v1215
    %v1257 = vpack.c.bf16 %v1226, %v1223
    %v1258 = vpack.c.bf16 %v1234, %v1231
    %v1259 = vpack.c.bf16 %v1242, %v1239
    %v1260 = vpack.c.bf16 %v1250, %v1247
    %s1261 = scalar_lea.vmem [#allocation7], 128
    %v1262 = vld [vmem:[%s1261] sm:$0xf]
    %v1263 = vld [vmem:[%s1261 + $0x4] sm:$0xf]
    %v1264 = vld [vmem:[%s1261 + $0x8] sm:$0xf]
    %v1265 = vld [vmem:[%s1261 + $0xc] sm:$0xf]
    %v1266 = vld [vmem:[%s1261 + $0x10] sm:$0xf]
    %v1267 = vld [vmem:[%s1261 + $0x14] sm:$0xf]
    %v1268 = vld [vmem:[%s1261 + $0x18] sm:$0xf]
    %v1269 = vld [vmem:[%s1261 + $0x1c] sm:$0xf]
    %v1270 = vld [vmem:[%s1261 + $0x20] sm:$0xf]
    %v1271 = vld [vmem:[%s1261 + $0x24] sm:$0xf]
    %v1272 = vld [vmem:[%s1261 + $0x28] sm:$0xf]
    %v1273 = vld [vmem:[%s1261 + $0x2c] sm:$0xf]
    %v1274 = vld [vmem:[%s1261 + $0x30] sm:$0xf]
    %v1275 = vld [vmem:[%s1261 + $0x34] sm:$0xf]
    %v1276 = vld [vmem:[%s1261 + $0x38] sm:$0xf]
    %v1277 = vld [vmem:[%s1261 + $0x3c] sm:$0xf]
    %s1278 = scalar_lea.vmem [#allocation8], 128
    %v1279 = vld [vmem:[%s1278] sm:$0xf]
    %v1280 = vld [vmem:[%s1278 + $0x4] sm:$0xf]
    %v1281 = vld [vmem:[%s1278 + $0x8] sm:$0xf]
    %v1282 = vld [vmem:[%s1278 + $0xc] sm:$0xf]
    %v1283 = vld [vmem:[%s1278 + $0x10] sm:$0xf]
    %v1284 = vld [vmem:[%s1278 + $0x14] sm:$0xf]
    %v1285 = vld [vmem:[%s1278 + $0x18] sm:$0xf]
    %v1286 = vld [vmem:[%s1278 + $0x1c] sm:$0xf]
    %v1287 = vld [vmem:[%s1278 + $0x20] sm:$0xf]
    %v1288 = vld [vmem:[%s1278 + $0x24] sm:$0xf]
    %v1289 = vld [vmem:[%s1278 + $0x28] sm:$0xf]
    %v1290 = vld [vmem:[%s1278 + $0x2c] sm:$0xf]
    %v1291 = vld [vmem:[%s1278 + $0x30] sm:$0xf]
    %v1292 = vld [vmem:[%s1278 + $0x34] sm:$0xf]
    %v1293 = vld [vmem:[%s1278 + $0x38] sm:$0xf]
    %v1294 = vld [vmem:[%s1278 + $0x3c] sm:$0xf]
    %v1311 = vunpack.c.l.b16 %v1279
    %v1312 = vunpack.c.l.b16 %v1280
    %v1313 = vunpack.c.l.b16 %v1281
    %v1314 = vunpack.c.l.b16 %v1282
    %v1315 = vunpack.c.l.b16 %v1283
    %v1316 = vunpack.c.l.b16 %v1284
    %v1317 = vunpack.c.l.b16 %v1285
    %v1318 = vunpack.c.l.b16 %v1286
    %v1319 = vunpack.c.l.b16 %v1287
    %v1320 = vunpack.c.l.b16 %v1288
    %v1321 = vunpack.c.l.b16 %v1289
    %v1322 = vunpack.c.l.b16 %v1290
    %v1323 = vunpack.c.l.b16 %v1291
    %v1324 = vunpack.c.l.b16 %v1292
    %v1325 = vunpack.c.l.b16 %v1293
    %v1326 = vunpack.c.l.b16 %v1294
    %v1327 = vpack.c.b16 %v1312, %v1311
    %v1328 = vpack.c.b16 %v1314, %v1313
    %v1329 = vpack.c.b16 %v1316, %v1315
    %v1330 = vpack.c.b16 %v1318, %v1317
    %v1331 = vpack.c.b16 %v1320, %v1319
    %v1332 = vpack.c.b16 %v1322, %v1321
    %v1333 = vpack.c.b16 %v1324, %v1323
    %v1334 = vpack.c.b16 %v1326, %v1325
    %1343 = vmatprep.subr.bf16.mxu0 0
    %1344 = vmatpush1.bf16.msra.mxu0 %v1327
    %1345 = vmatprep.subr.bf16.mxu0 0
    %1346 = vmatpush1.bf16.msra.mxu0 %v1328
    %1347 = vmatprep.subr.bf16.mxu0 0
    %1348 = vmatpush1.bf16.msra.mxu0 %v1329
    %1349 = vmatprep.subr.bf16.mxu0 0
    %1350 = vmatpush1.bf16.msra.mxu0 %v1330
    %1351 = vmatprep.subr.bf16.mxu0 0
    %1352 = vmatpush1.bf16.msra.mxu0 %v1331
    %1353 = vmatprep.subr.bf16.mxu0 0
    %1354 = vmatpush1.bf16.msra.mxu0 %v1332
    %1355 = vmatprep.subr.bf16.mxu0 0
    %1356 = vmatpush1.bf16.msra.mxu0 %v1333
    %1357 = vmatprep.subr.bf16.mxu0 0
    %1358 = vmatpush1.bf16.msra.mxu0 %v1334
    %1359 = vmatprep.subr.bf16.mxu0 0
    %1360 = vmatpush1.bf16.msra.mxu0 0
    %1361 = vmatprep.subr.bf16.mxu0 0
    %1362 = vmatpush1.bf16.msra.mxu0 0
    %1363 = vmatprep.subr.bf16.mxu0 0
    %1364 = vmatpush1.bf16.msra.mxu0 0
    %1365 = vmatprep.subr.bf16.mxu0 0
    %1366 = vmatpush1.bf16.msra.mxu0 0
    %1367 = vmatprep.subr.bf16.mxu0 0
    %1368 = vmatpush1.bf16.msra.mxu0 0
    %1369 = vmatprep.subr.bf16.mxu0 0
    %1370 = vmatpush1.bf16.msra.mxu0 0
    %1371 = vmatprep.subr.bf16.mxu0 0
    %1372 = vmatpush1.bf16.msra.mxu0 0
    %1373 = vmatprep.subr.bf16.mxu0 0
    %1374 = vmatpush1.bf16.msra.mxu0 0
    %1375 = vmatprep.mubr.bf16.mxu0 0
    %1376 = vmatmul.mubr.bf16.gmra.mrb[0].mxu0 %v1148
    %v1377 = vpop.f32.mrb[0].mxu0
    %v1378 = vadd.f32 0.0, %v1377
    %v1379 = vpop.f32.mrb[0].mxu0
    %v1380 = vpop.f32.mrb[0].mxu0
    %v1381 = vadd.f32 0.0, %v1380
    %v1382 = vpop.f32.mrb[0].mxu0
    %1383 = vmatprep.mubr.bf16.mxu0 0
    %1384 = vmatmul.mubr.bf16.gmra.mrb[0].mxu0 %v1149
    %v1385 = vpop.f32.mrb[0].mxu0
    %v1386 = vadd.f32 0.0, %v1385
    %v1387 = vpop.f32.mrb[0].mxu0
    %v1388 = vpop.f32.mrb[0].mxu0
    %v1389 = vadd.f32 0.0, %v1388
    %v1390 = vpop.f32.mrb[0].mxu0
    %1391 = vmatprep.mubr.bf16.mxu0 0
    %1392 = vmatmul.mubr.bf16.gmra.mrb[0].mxu0 %v1150
    %v1393 = vpop.f32.mrb[0].mxu0
    %v1394 = vadd.f32 0.0, %v1393
    %v1395 = vpop.f32.mrb[0].mxu0
    %v1396 = vpop.f32.mrb[0].mxu0
    %v1397 = vadd.f32 0.0, %v1396
    %v1398 = vpop.f32.mrb[0].mxu0
    %1399 = vmatprep.mubr.bf16.mxu0 0
    %1400 = vmatmul.mubr.bf16.gmra.mrb[0].mxu0 %v1151
    %v1401 = vpop.f32.mrb[0].mxu0
    %v1402 = vadd.f32 0.0, %v1401
    %v1403 = vpop.f32.mrb[0].mxu0
    %v1404 = vpop.f32.mrb[0].mxu0
    %v1405 = vadd.f32 0.0, %v1404
    %v1406 = vpop.f32.mrb[0].mxu0
    %1407 = vmatprep.mubr.bf16.mxu0 0
    %1408 = vmatmul.mubr.bf16.gmra.mrb[0].mxu0 %v1152
    %v1409 = vpop.f32.mrb[0].mxu0
    %v1410 = vadd.f32 0.0, %v1409
    %v1411 = vpop.f32.mrb[0].mxu0
    %v1412 = vpop.f32.mrb[0].mxu0
    %v1413 = vadd.f32 0.0, %v1412
    %v1414 = vpop.f32.mrb[0].mxu0
    %1415 = vmatprep.mubr.bf16.mxu0 0
    %1416 = vmatmul.mubr.bf16.gmra.mrb[0].mxu0 %v1153
    %v1417 = vpop.f32.mrb[0].mxu0
    %v1418 = vadd.f32 0.0, %v1417
    %v1419 = vpop.f32.mrb[0].mxu0
    %v1420 = vpop.f32.mrb[0].mxu0
    %v1421 = vadd.f32 0.0, %v1420
    %v1422 = vpop.f32.mrb[0].mxu0
    %1423 = vmatprep.mubr.bf16.mxu0 0
    %1424 = vmatmul.mubr.bf16.gmra.mrb[0].mxu0 %v1154
    %v1425 = vpop.f32.mrb[0].mxu0
    %v1426 = vadd.f32 0.0, %v1425
    %v1427 = vpop.f32.mrb[0].mxu0
    %v1428 = vpop.f32.mrb[0].mxu0
    %v1429 = vadd.f32 0.0, %v1428
    %v1430 = vpop.f32.mrb[0].mxu0
    %1431 = vmatprep.mubr.bf16.mxu0 0
    %1432 = vmatmul.mubr.bf16.gmra.mrb[0].mxu0 %v1155
    %v1433 = vpop.f32.mrb[0].mxu0
    %v1434 = vadd.f32 0.0, %v1433
    %v1435 = vpop.f32.mrb[0].mxu0
    %v1436 = vpop.f32.mrb[0].mxu0
    %v1437 = vadd.f32 0.0, %v1436
    %v1438 = vpop.f32.mrb[0].mxu0
    %1439 = vdwg.mxu0
    %v1456 = vunpack.c.l.b16 %v1262
    %v1457 = vunpack.c.l.b16 %v1263
    %v1458 = vunpack.c.l.b16 %v1264
    %v1459 = vunpack.c.l.b16 %v1265
    %v1460 = vunpack.c.l.b16 %v1266
    %v1461 = vunpack.c.l.b16 %v1267
    %v1462 = vunpack.c.l.b16 %v1268
    %v1463 = vunpack.c.l.b16 %v1269
    %v1464 = vunpack.c.l.b16 %v1270
    %v1465 = vunpack.c.l.b16 %v1271
    %v1466 = vunpack.c.l.b16 %v1272
    %v1467 = vunpack.c.l.b16 %v1273
    %v1468 = vunpack.c.l.b16 %v1274
    %v1469 = vunpack.c.l.b16 %v1275
    %v1470 = vunpack.c.l.b16 %v1276
    %v1471 = vunpack.c.l.b16 %v1277
    %v1472 = vpack.c.b16 %v1457, %v1456
    %v1473 = vpack.c.b16 %v1459, %v1458
    %v1474 = vpack.c.b16 %v1461, %v1460
    %v1475 = vpack.c.b16 %v1463, %v1462
    %v1476 = vpack.c.b16 %v1465, %v1464
    %v1477 = vpack.c.b16 %v1467, %v1466
    %v1478 = vpack.c.b16 %v1469, %v1468
    %v1479 = vpack.c.b16 %v1471, %v1470
    %1488 = vmatprep.subr.bf16.mxu0 0
    %1489 = vmatpush1.bf16.msra.mxu0 %v1472
    %1490 = vmatprep.subr.bf16.mxu0 0
    %1491 = vmatpush1.bf16.msra.mxu0 %v1473
    %1492 = vmatprep.subr.bf16.mxu0 0
    %1493 = vmatpush1.bf16.msra.mxu0 %v1474
    %1494 = vmatprep.subr.bf16.mxu0 0
    %1495 = vmatpush1.bf16.msra.mxu0 %v1475
    %1496 = vmatprep.subr.bf16.mxu0 0
    %1497 = vmatpush1.bf16.msra.mxu0 %v1476
    %1498 = vmatprep.subr.bf16.mxu0 0
    %1499 = vmatpush1.bf16.msra.mxu0 %v1477
    %1500 = vmatprep.subr.bf16.mxu0 0
    %1501 = vmatpush1.bf16.msra.mxu0 %v1478
    %1502 = vmatprep.subr.bf16.mxu0 0
    %1503 = vmatpush1.bf16.msra.mxu0 %v1479
    %1504 = vmatprep.subr.bf16.mxu0 0
    %1505 = vmatpush1.bf16.msra.mxu0 0
    %1506 = vmatprep.subr.bf16.mxu0 0
    %1507 = vmatpush1.bf16.msra.mxu0 0
    %1508 = vmatprep.subr.bf16.mxu0 0
    %1509 = vmatpush1.bf16.msra.mxu0 0
    %1510 = vmatprep.subr.bf16.mxu0 0
    %1511 = vmatpush1.bf16.msra.mxu0 0
    %1512 = vmatprep.subr.bf16.mxu0 0
    %1513 = vmatpush1.bf16.msra.mxu0 0
    %1514 = vmatprep.subr.bf16.mxu0 0
    %1515 = vmatpush1.bf16.msra.mxu0 0
    %1516 = vmatprep.subr.bf16.mxu0 0
    %1517 = vmatpush1.bf16.msra.mxu0 0
    %1518 = vmatprep.subr.bf16.mxu0 0
    %1519 = vmatpush1.bf16.msra.mxu0 0
    %1520 = vmatprep.mubr.bf16.mxu0 0
    %1521 = vmatmul.mubr.bf16.gmra.mrb[0].mxu0 %v1253
    %v1522 = vpop.f32.mrb[0].mxu0
    %v1523 = vadd.f32 %v1378, %v1522
    %v1524 = vpop.f32.mrb[0].mxu0
    %v1525 = vpop.f32.mrb[0].mxu0
    %v1526 = vadd.f32 %v1381, %v1525
    %v1527 = vpop.f32.mrb[0].mxu0
    %1528 = vmatprep.mubr.bf16.mxu0 0
    %1529 = vmatmul.mubr.bf16.gmra.mrb[0].mxu0 %v1254
    %v1530 = vpop.f32.mrb[0].mxu0
    %v1531 = vadd.f32 %v1386, %v1530
    %v1532 = vpop.f32.mrb[0].mxu0
    %v1533 = vpop.f32.mrb[0].mxu0
    %v1534 = vadd.f32 %v1389, %v1533
    %v1535 = vpop.f32.mrb[0].mxu0
    %1536 = vmatprep.mubr.bf16.mxu0 0
    %1537 = vmatmul.mubr.bf16.gmra.mrb[0].mxu0 %v1255
    %v1538 = vpop.f32.mrb[0].mxu0
    %v1539 = vadd.f32 %v1394, %v1538
    %v1540 = vpop.f32.mrb[0].mxu0
    %v1541 = vpop.f32.mrb[0].mxu0
    %v1542 = vadd.f32 %v1397, %v1541
    %v1543 = vpop.f32.mrb[0].mxu0
    %1544 = vmatprep.mubr.bf16.mxu0 0
    %1545 = vmatmul.mubr.bf16.gmra.mrb[0].mxu0 %v1256
    %v1546 = vpop.f32.mrb[0].mxu0
    %v1547 = vadd.f32 %v1402, %v1546
    %v1548 = vpop.f32.mrb[0].mxu0
    %v1549 = vpop.f32.mrb[0].mxu0
    %v1550 = vadd.f32 %v1405, %v1549
    %v1551 = vpop.f32.mrb[0].mxu0
    %1552 = vmatprep.mubr.bf16.mxu0 0
    %1553 = vmatmul.mubr.bf16.gmra.mrb[0].mxu0 %v1257
    %v1554 = vpop.f32.mrb[0].mxu0
    %v1555 = vadd.f32 %v1410, %v1554
    %v1556 = vpop.f32.mrb[0].mxu0
    %v1557 = vpop.f32.mrb[0].mxu0
    %v1558 = vadd.f32 %v1413, %v1557
    %v1559 = vpop.f32.mrb[0].mxu0
    %1560 = vmatprep.mubr.bf16.mxu0 0
    %1561 = vmatmul.mubr.bf16.gmra.mrb[0].mxu0 %v1258
    %v1562 = vpop.f32.mrb[0].mxu0
    %v1563 = vadd.f32 %v1418, %v1562
    %v1564 = vpop.f32.mrb[0].mxu0
    %v1565 = vpop.f32.mrb[0].mxu0
    %v1566 = vadd.f32 %v1421, %v1565
    %v1567 = vpop.f32.mrb[0].mxu0
    %1568 = vmatprep.mubr.bf16.mxu0 0
    %1569 = vmatmul.mubr.bf16.gmra.mrb[0].mxu0 %v1259
    %v1570 = vpop.f32.mrb[0].mxu0
    %v1571 = vadd.f32 %v1426, %v1570
    %v1572 = vpop.f32.mrb[0].mxu0
    %v1573 = vpop.f32.mrb[0].mxu0
    %v1574 = vadd.f32 %v1429, %v1573
    %v1575 = vpop.f32.mrb[0].mxu0
    %1576 = vmatprep.mubr.bf16.mxu0 0
    %1577 = vmatmul.mubr.bf16.gmra.mrb[0].mxu0 %v1260
    %v1578 = vpop.f32.mrb[0].mxu0
    %v1579 = vadd.f32 %v1434, %v1578
    %v1580 = vpop.f32.mrb[0].mxu0
    %v1581 = vpop.f32.mrb[0].mxu0
    %v1582 = vadd.f32 %v1437, %v1581
    %v1583 = vpop.f32.mrb[0].mxu0
    %1584 = vdwg.mxu0
    %s1585 = scalar_lea.vmem %s4, 2
    %v1586 = vld [vmem:[%s1585] sm:$0x1]
    %v1588 = vlaneseq
    %v1589 = vshrl.u32 %v1588, 7
    %v1590 = vsub.s32 0, %v1589
    %v1591 = vrot.slane %v1586, %v1590
    %v1593 = vadd.f32 %v1523, %v1591
    %v1594 = vadd.f32 %v1526, %v1591
    %v1595 = vadd.f32 %v1531, %v1591
    %v1596 = vadd.f32 %v1534, %v1591
    %v1597 = vadd.f32 %v1539, %v1591
    %v1598 = vadd.f32 %v1542, %v1591
    %v1599 = vadd.f32 %v1547, %v1591
    %v1600 = vadd.f32 %v1550, %v1591
    %v1601 = vadd.f32 %v1555, %v1591
    %v1602 = vadd.f32 %v1558, %v1591
    %v1603 = vadd.f32 %v1563, %v1591
    %v1604 = vadd.f32 %v1566, %v1591
    %v1605 = vadd.f32 %v1571, %v1591
    %v1606 = vadd.f32 %v1574, %v1591
    %v1607 = vadd.f32 %v1579, %v1591
    %v1608 = vadd.f32 %v1582, %v1591
    %1609 = vst [vmem:[#allocation10] sm:$0xff] %v1593
    %1610 = vst [vmem:[#allocation10 + $0x8] sm:$0xff] %v1594
    %1611 = vst [vmem:[#allocation10 + $0x10] sm:$0xff] %v1595
    %1612 = vst [vmem:[#allocation10 + $0x18] sm:$0xff] %v1596
    %1613 = vst [vmem:[#allocation10 + $0x20] sm:$0xff] %v1597
    %1614 = vst [vmem:[#allocation10 + $0x28] sm:$0xff] %v1598
    %1615 = vst [vmem:[#allocation10 + $0x30] sm:$0xff] %v1599
    %1616 = vst [vmem:[#allocation10 + $0x38] sm:$0xff] %v1600
    %1617 = vst [vmem:[#allocation10 + $0x40] sm:$0xff] %v1601
    %1618 = vst [vmem:[#allocation10 + $0x48] sm:$0xff] %v1602
    %1619 = vst [vmem:[#allocation10 + $0x50] sm:$0xff] %v1603
    %1620 = vst [vmem:[#allocation10 + $0x58] sm:$0xff] %v1604
    %1621 = vst [vmem:[#allocation10 + $0x60] sm:$0xff] %v1605
    %1622 = vst [vmem:[#allocation10 + $0x68] sm:$0xff] %v1606
    %1623 = vst [vmem:[#allocation10 + $0x70] sm:$0xff] %v1607
    %1624 = vst [vmem:[#allocation10 + $0x78] sm:$0xff] %v1608
    // Predicated region
    $region38: #{tpu_custom_call.1} parent=1 // pred_check
      _
    $region39: #{tpu_custom_call.1} parent=1 // pred_check_branch
      %1626 = sbr.rel (0) target = $region41
    $region40: #{tpu_custom_call.1} parent=1 // pred_region
      %s1628 = ssub.s32 2048, 2048
      %1629 = vsyncadd [#allocation4], %s1628
      %s1630 = sshll.u32 [#allocation10], 4
      %s1631 = int_to_ptr.vmem [resolvable:$true] %s1630
      %1636 = dma.vmem_to_hbm [thread:$0]  %s1631, 2048, %s5, [#allocation4], 128, 128, 8
    $region41: #{tpu_custom_call.1} parent=1 // pred_fallthru
      _
    // Predicated region
    $region42: #{tpu_custom_call.1} parent=1 // pred_check
      _
    $region43: #{tpu_custom_call.1} parent=1 // pred_check_branch
      %1638 = sbr.rel (0) target = $region45
    $region44: #{tpu_custom_call.1} parent=1 // pred_region
      %1639 = dma.done [#allocation4], 2048
    $region45: #{tpu_custom_call.1} parent=1 // pred_fallthru
      _
    %1640 = vsyncpa [#allocation3], 1
    %1641 = vsyncpa [#allocation6], 1
    %1642 = vsyncpa [#allocation9], 1
    %1643 = vsyncpa [#allocation4], 1

</llo_original>
